<compile_context>
chip_gen: v5e
topology: v5e:2x2
jax: 0.10.0
libtpu: 0.0.40
codegen_flags: <defaults>
</compile_context>

<pallas_src>
import jax
import jax.numpy as jnp
from jax.experimental import pallas as pl
from jax.experimental.pallas import tpu as pltpu

HIDDEN = 512


def _round_up(x, m):
    return ((x + m - 1) // m) * m


# ---------------------------------------------------------------------------
# Kernels
# ---------------------------------------------------------------------------
def _disc_kernel_fullk(x_ref, w1_ref, b1_ref, w2_ref, b2_ref, w3_ref, b3_ref,
                       o_ref):
    """Single-K-block fast path.  Grid = (batch_tiles,).

    x_ref: [tm, img_dim] f32 (cast to bf16 in-kernel), w1_ref: [img_dim, 512] bf16,
    w2_ref: [512, 512] bf16, w3_ref: [1, 512] bf16 row, b1/b2: [1, 512] f32,
    b3_ref: [1, 1] f32 in SMEM, o_ref: [tm, 1] f32.
    """
    x = x_ref[...].astype(jnp.bfloat16)
    # Layer 1: MXU matmul, f32 accumulation, bias + ReLU.
    h1 = jnp.dot(x, w1_ref[...], preferred_element_type=jnp.float32)
    h1 = jnp.maximum(h1 + b1_ref[...], 0.0)
    # Layer 2: Linear(512, 512) + ReLU.
    h2 = jnp.dot(h1.astype(w2_ref.dtype), w2_ref[...],
                 preferred_element_type=jnp.float32)
    h2 = jnp.maximum(h2 + b2_ref[...], 0.0)
    # Layer 3: Linear(512, 1) as VPU multiply + XLU lane reduction.
    out = jnp.sum(h2 * w3_ref[...].astype(jnp.float32), axis=-1, keepdims=True)
    o_ref[...] = (out + b3_ref[0, 0]).astype(o_ref.dtype)


def _disc_kernel_ktiled(x_ref, w1_ref, b1_ref, w2_ref, b2_ref, w3_ref, b3_ref,
                        o_ref, acc_ref):
    """K-tiled fallback for very large img_dim.  Grid = (batch_tiles, k_tiles)."""
    k = pl.program_id(1)

    @pl.when(k == 0)
    def _init():
        # Initialize the accumulator with the broadcast bias (same store cost as
        # zeros, removes the epilogue bias add).
        acc_ref[...] = jnp.broadcast_to(b1_ref[...], acc_ref.shape)

    # Layer 1 partial product: bf16 x bf16 -> f32 accumulate on the MXU.
    acc_ref[...] += jnp.dot(x_ref[...].astype(jnp.bfloat16), w1_ref[...],
                            preferred_element_type=jnp.float32)

    @pl.when(k == pl.num_programs(1) - 1)
    def _epilogue():
        h1 = jnp.maximum(acc_ref[...], 0.0)
        h2 = jnp.dot(h1.astype(w2_ref.dtype), w2_ref[...],
                     preferred_element_type=jnp.float32)
        h2 = jnp.maximum(h2 + b2_ref[...], 0.0)
        out = jnp.sum(h2 * w3_ref[...].astype(jnp.float32), axis=-1,
                      keepdims=True)
        o_ref[...] = (out + b3_ref[0, 0]).astype(o_ref.dtype)


# ---------------------------------------------------------------------------
# Tile planning
# ---------------------------------------------------------------------------
def _choose_tiles(B, img_dim, *, tm_default=512, vmem_budget=24 << 20):
    """Pick (tm, b_pad, tk, full_k) under a conservative VMEM budget."""
    b_align = _round_up(B, 8)                 # sublane alignment
    tm = min(tm_default, b_align)             # multiple of 8 (and of 256 when large)
    b_pad = _round_up(B, tm)

    def est(tk):
        x_tile = tm * tk * 4 * 2              # f32 x tile, double-buffered
        w1_blk = tk * HIDDEN * 2 * 2          # bf16 w1 block, double-buffered
        w2_blk = HIDDEN * HIDDEN * 2 * 2      # bf16 w2, double-buffered
        acc = tm * HIDDEN * 4                 # f32 accumulator (fallback only)
        small = 4 * HIDDEN * 4 * 2 + tm * 4 * 2
        return x_tile + w1_blk + w2_blk + acc + small

    if est(img_dim) <= vmem_budget:
        return tm, b_pad, img_dim, True       # fast path: no K grid

    tk = 2048
    while tk > 256 and est(tk) > vmem_budget:
        tk //= 2
    tk = min(tk, _round_up(img_dim, 128))
    return tm, b_pad, tk, False


# ---------------------------------------------------------------------------
# Forward
# ---------------------------------------------------------------------------
def discriminator_forward(x_nchw, params, *, tm=512):
    """x_nchw: [B, C, H, W] f32. params: dict with bf16 weights, f32 biases."""
    B = x_nchw.shape[0]
    img_dim = 1
    for d in x_nchw.shape[1:]:
        img_dim *= int(d)

    # Flatten (row-major, identical to torch.nn.Flatten).  Keep f32; the bf16
    # cast happens inside the kernel (avoids a wrapper-side astype HBM copy).
    x_flat = x_nchw.reshape(B, img_dim)

    w1, b1, w2, b2, w3, b3 = (params["w1"], params["b1"], params["w2"],
                              params["b2"], params["w3"], params["b3"])

    tm, b_pad, tk, full_k = _choose_tiles(B, img_dim, tm_default=tm)

    if b_pad != B:
        x_flat = jnp.pad(x_flat, ((0, b_pad - B), (0, 0)))

    if full_k:
        grid = (b_pad // tm,)
        out = pl.pallas_call(
            _disc_kernel_fullk,
            out_shape=jax.ShapeDtypeStruct((b_pad, 1), jnp.float32),
            grid_spec=pltpu.PrefetchScalarGridSpec(
                num_scalar_prefetch=0,
                grid=grid,
                in_specs=[
                    pl.BlockSpec((tm, img_dim), lambda i: (i, 0)),        # x tile (f32)
                    pl.BlockSpec((img_dim, HIDDEN), lambda i: (0, 0)),    # w1 whole
                    pl.BlockSpec((1, HIDDEN), lambda i: (0, 0)),          # b1
                    pl.BlockSpec((HIDDEN, HIDDEN), lambda i: (0, 0)),     # w2
                    pl.BlockSpec((1, HIDDEN), lambda i: (0, 0)),          # b2
                    pl.BlockSpec((1, HIDDEN), lambda i: (0, 0)),          # w3 row
                    pl.BlockSpec(memory_space=pltpu.MemorySpace.SMEM),    # b3 scalar
                ],
                out_specs=pl.BlockSpec((tm, 1), lambda i: (i, 0)),
            ),
            compiler_params=pltpu.CompilerParams(
                dimension_semantics=("parallel",),
                vmem_limit_bytes=32 << 20,
            ),
        )(x_flat, w1, b1, w2, b2, w3, b3)
    else:
        # K-tiled fallback for very large img_dim.
        # TODO(synk): for training loops with huge img_dim, pre-pad w1 once at
        # init time instead of per call.
        k_pad = _round_up(img_dim, tk)
        if k_pad != img_dim:
            x_flat = jnp.pad(x_flat, ((0, 0), (0, k_pad - img_dim)))
            w1 = jnp.pad(w1, ((0, k_pad - img_dim), (0, 0)))
        grid = (b_pad // tm, k_pad // tk)
        out = pl.pallas_call(
            _disc_kernel_ktiled,
            out_shape=jax.ShapeDtypeStruct((b_pad, 1), jnp.float32),
            grid_spec=pltpu.PrefetchScalarGridSpec(
                num_scalar_prefetch=0,
                grid=grid,
                in_specs=[
                    pl.BlockSpec((tm, tk), lambda i, k: (i, k)),          # x tile
                    pl.BlockSpec((tk, HIDDEN), lambda i, k: (k, 0)),      # w1 K-tile
                    pl.BlockSpec((1, HIDDEN), lambda i, k: (0, 0)),       # b1
                    pl.BlockSpec((HIDDEN, HIDDEN), lambda i, k: (0, 0)),  # w2
                    pl.BlockSpec((1, HIDDEN), lambda i, k: (0, 0)),       # b2
                    pl.BlockSpec((1, HIDDEN), lambda i, k: (0, 0)),       # w3 row
                    pl.BlockSpec(memory_space=pltpu.MemorySpace.SMEM),    # b3 scalar
                ],
                out_specs=pl.BlockSpec((tm, 1), lambda i, k: (i, 0)),
                scratch_shapes=[pltpu.VMEM((tm, HIDDEN), jnp.float32)],
            ),
            compiler_params=pltpu.CompilerParams(
                dimension_semantics=("parallel", "arbitrary"),
                vmem_limit_bytes=32 << 20,
            ),
        )(x_flat, w1, b1, w2, b2, w3, b3)

    return out[:B]


# ---------------------------------------------------------------------------
# Params / reference
# ---------------------------------------------------------------------------
def init_params(key, img_dim):
    """Mimics PyTorch nn.Linear default init: U(-1/sqrt(fan_in), 1/sqrt(fan_in)).
    Weights stored [in, out] (transposed from torch's [out, in]) in bf16; w3 is
    kept as a lane-major [1, 512] row vector; biases stay f32."""
    keys = jax.random.split(key, 6)

    def lin(kw, kb, fan_in, fan_out):
        bound = 1.0 / (fan_in ** 0.5)
        w = jax.random.uniform(kw, (fan_in, fan_out), jnp.float32, -bound, bound)
        b = jax.random.uniform(kb, (1, fan_out), jnp.float32, -bound, bound)
        return w, b

    w1, b1 = lin(keys[0], keys[1], img_dim, HIDDEN)
    w2, b2 = lin(keys[2], keys[3], HIDDEN, HIDDEN)
    w3, b3 = lin(keys[4], keys[5], HIDDEN, 1)
    return {
        "w1": w1.astype(jnp.bfloat16), "b1": b1,
        "w2": w2.astype(jnp.bfloat16), "b2": b2,
        "w3": w3.T.astype(jnp.bfloat16),        # [1, 512] row vector
        "b3": b3.reshape(1, 1),                  # [1, 1] f32 scalar
    }


def reference_forward(x_nchw, params):
    """Pure-JAX reference with the same dtype behavior (bf16 ops, f32 accum)."""
    B = x_nchw.shape[0]
    x = x_nchw.reshape(B, -1).astype(jnp.bfloat16)
    h1 = jnp.dot(x, params["w1"], preferred_element_type=jnp.float32) + params["b1"]
    h1 = jnp.maximum(h1, 0.0)
    h2 = jnp.dot(h1.astype(jnp.bfloat16), params["w2"],
                 preferred_element_type=jnp.float32) + params["b2"]
    h2 = jnp.maximum(h2, 0.0)
    out = jnp.sum(h2 * params["w3"].astype(jnp.float32), axis=-1,
                  keepdims=True) + params["b3"]
    return out


if __name__ == "__main__":
    key = jax.random.PRNGKey(0)
    k_x, k_p = jax.random.split(key)

    # Small, module-consistent shapes: batch=2, channels=4, spatial=16x16
    # => img_dim = 4*16*16 = 1024.
    B, C, H, W = 2, 4, 16, 16
    x = jax.random.normal(k_x, (B, C, H, W), jnp.float32)

    params = init_params(k_p, C * H * W)

    out = discriminator_forward(x, params)
    out = jax.block_until_ready(out)

    ref = reference_forward(x, params)
    assert out.shape == (B, 1), out.shape
    assert jnp.allclose(out, ref, atol=1e-2, rtol=1e-2), (out, ref)

    print("KERNEL_OK")
</pallas_src>

<mosaic_0001>
module attributes {stable_mosaic.version = 11 : i64} {
  func.func @_disc_kernel_fullk(%arg0: i32, %arg1: memref<8x1024xf32, #tpu.memory_space<vmem>>, %arg2: memref<1024x512xbf16, #tpu.memory_space<vmem>>, %arg3: memref<1x512xf32, #tpu.memory_space<vmem>>, %arg4: memref<512x512xbf16, #tpu.memory_space<vmem>>, %arg5: memref<1x512xf32, #tpu.memory_space<vmem>>, %arg6: memref<1x512xbf16, #tpu.memory_space<vmem>>, %arg7: memref<1x1xf32, #tpu.memory_space<smem>>, %arg8: memref<8x1xf32, #tpu.memory_space<vmem>>) attributes {dimension_semantics = [#tpu.dimension_semantics<parallel>], iteration_bounds = array<i64: 1>, scalar_prefetch = 0 : i64, scratch_operands = 0 : i64, tpu.core_type = #tpu.core_type<tc>, window_params = [{transform_indices = @transform_0, window_bounds = array<i64: 8, 1024>}, {pipeline_mode = #tpu.pipeline_mode<synchronous>, transform_indices = @transform_1, window_bounds = array<i64: 1024, 512>}, {pipeline_mode = #tpu.pipeline_mode<synchronous>, transform_indices = @transform_2, window_bounds = array<i64: 1, 512>}, {pipeline_mode = #tpu.pipeline_mode<synchronous>, transform_indices = @transform_3, window_bounds = array<i64: 512, 512>}, {pipeline_mode = #tpu.pipeline_mode<synchronous>, transform_indices = @transform_4, window_bounds = array<i64: 1, 512>}, {pipeline_mode = #tpu.pipeline_mode<synchronous>, transform_indices = @transform_5, window_bounds = array<i64: 1, 512>}, {transform_indices = @transform_6, window_bounds = array<i64: 1, 1>}, {transform_indices = @transform_7, window_bounds = array<i64: 8, 1>}]} {
    %c0 = arith.constant 0 : index
    %c0_0 = arith.constant 0 : index
    %0 = vector.load %arg1[%c0, %c0_0] : memref<8x1024xf32, #tpu.memory_space<vmem>>, vector<8x1024xf32>
    %1 = arith.truncf %0 : vector<8x1024xf32> to vector<8x1024xbf16>
    %c0_1 = arith.constant 0 : index
    %c0_2 = arith.constant 0 : index
    %2 = vector.load %arg2[%c0_1, %c0_2] : memref<1024x512xbf16, #tpu.memory_space<vmem>>, vector<1024x512xbf16>
    %cst = arith.constant dense<0.000000e+00> : vector<8x512xf32>
    %3 = tpu.matmul %1, %2, %cst {dimension_numbers = #tpu.dot_dimension_numbers<[1], [0], [0], [1], [0, 0, 1, 1], [], []>} : vector<8x1024xbf16>, vector<1024x512xbf16>, vector<8x512xf32> -> vector<8x512xf32>
    %c0_3 = arith.constant 0 : index
    %c0_4 = arith.constant 0 : index
    %4 = vector.load %arg3[%c0_3, %c0_4] : memref<1x512xf32, #tpu.memory_space<vmem>>, vector<1x512xf32>
    %5 = vector.broadcast %4 : vector<1x512xf32> to vector<8x512xf32>
    %6 = arith.addf %3, %5 : vector<8x512xf32>
    %cst_5 = arith.constant 0.000000e+00 : f32
    %7 = vector.broadcast %cst_5 : f32 to vector<8x512xf32>
    %8 = arith.maximumf %6, %7 : vector<8x512xf32>
    %9 = arith.truncf %8 : vector<8x512xf32> to vector<8x512xbf16>
    %c0_6 = arith.constant 0 : index
    %c0_7 = arith.constant 0 : index
    %10 = vector.load %arg4[%c0_6, %c0_7] : memref<512x512xbf16, #tpu.memory_space<vmem>>, vector<512x512xbf16>
    %cst_8 = arith.constant dense<0.000000e+00> : vector<8x512xf32>
    %11 = tpu.matmul %9, %10, %cst_8 {dimension_numbers = #tpu.dot_dimension_numbers<[1], [0], [0], [1], [0, 0, 1, 1], [], []>} : vector<8x512xbf16>, vector<512x512xbf16>, vector<8x512xf32> -> vector<8x512xf32>
    %c0_9 = arith.constant 0 : index
    %c0_10 = arith.constant 0 : index
    %12 = vector.load %arg5[%c0_9, %c0_10] : memref<1x512xf32, #tpu.memory_space<vmem>>, vector<1x512xf32>
    %13 = vector.broadcast %12 : vector<1x512xf32> to vector<8x512xf32>
    %14 = arith.addf %11, %13 : vector<8x512xf32>
    %cst_11 = arith.constant 0.000000e+00 : f32
    %15 = vector.broadcast %cst_11 : f32 to vector<8x512xf32>
    %16 = arith.maximumf %14, %15 : vector<8x512xf32>
    %c0_12 = arith.constant 0 : index
    %c0_13 = arith.constant 0 : index
    %17 = vector.load %arg6[%c0_12, %c0_13] : memref<1x512xbf16, #tpu.memory_space<vmem>>, vector<1x512xbf16>
    %18 = arith.extf %17 : vector<1x512xbf16> to vector<1x512xf32>
    %19 = vector.broadcast %18 : vector<1x512xf32> to vector<8x512xf32>
    %20 = arith.mulf %16, %19 : vector<8x512xf32>
    %cst_14 = arith.constant dense<0.000000e+00> : vector<8xf32>
    %21 = vector.multi_reduction <add>, %20, %cst_14 [1] : vector<8x512xf32> to vector<8xf32>
    %22 = vector.shape_cast %21 : vector<8xf32> to vector<8x1xf32>
    %c0_15 = arith.constant 0 : index
    %c0_16 = arith.constant 0 : index
    %23 = memref.load %arg7[%c0_15, %c0_16] : memref<1x1xf32, #tpu.memory_space<smem>>
    %24 = vector.broadcast %23 : f32 to vector<8x1xf32>
    %25 = arith.addf %22, %24 : vector<8x1xf32>
    %c0_17 = arith.constant 0 : index
    %c0_18 = arith.constant 0 : index
    %26 = vector.load %arg8[%c0_17, %c0_18] : memref<8x1xf32, #tpu.memory_space<vmem>>, vector<8x1xf32>
    tpu.vector_store %arg8[%c0_17, %c0_18], %25 {strides = array<i32>} : memref<8x1xf32, #tpu.memory_space<vmem>>, vector<8x1xf32>,
    return
  }
  func.func @transform_0(%arg0: i32) -> (i32, i32) {
    %c0_i32 = arith.constant 0 : i32
    %c0_i32_0 = arith.constant 0 : i32
    return %arg0, %c0_i32 : i32, i32
  }
  func.func @transform_1(%arg0: i32) -> (i32, i32) {
    %c0_i32 = arith.constant 0 : i32
    %c0_i32_0 = arith.constant 0 : i32
    %c0_i32_1 = arith.constant 0 : i32
    return %c0_i32, %c0_i32_0 : i32, i32
  }
  func.func @transform_2(%arg0: i32) -> (i32, i32) {
    %c0_i32 = arith.constant 0 : i32
    %c0_i32_0 = arith.constant 0 : i32
    %c0_i32_1 = arith.constant 0 : i32
    return %c0_i32, %c0_i32_0 : i32, i32
  }
  func.func @transform_3(%arg0: i32) -> (i32, i32) {
    %c0_i32 = arith.constant 0 : i32
    %c0_i32_0 = arith.constant 0 : i32
    %c0_i32_1 = arith.constant 0 : i32
    return %c0_i32, %c0_i32_0 : i32, i32
  }
  func.func @transform_4(%arg0: i32) -> (i32, i32) {
    %c0_i32 = arith.constant 0 : i32
    %c0_i32_0 = arith.constant 0 : i32
    %c0_i32_1 = arith.constant 0 : i32
    return %c0_i32, %c0_i32_0 : i32, i32
  }
  func.func @transform_5(%arg0: i32) -> (i32, i32) {
    %c0_i32 = arith.constant 0 : i32
    %c0_i32_0 = arith.constant 0 : i32
    %c0_i32_1 = arith.constant 0 : i32
    return %c0_i32, %c0_i32_0 : i32, i32
  }
  func.func @transform_6(%arg0: i32) -> (i32, i32) {
    %c0_i32 = arith.constant 0 : i32
    %c0_i32_0 = arith.constant 0 : i32
    %c0_i32_1 = arith.constant 0 : i32
    return %c0_i32, %c0_i32_0 : i32, i32
  }
  func.func @transform_7(%arg0: i32) -> (i32, i32) {
    %c0_i32 = arith.constant 0 : i32
    %c0_i32_0 = arith.constant 0 : i32
    return %arg0, %c0_i32 : i32, i32
  }
}

</mosaic_0001>

<llo_original>
// kernel: tpu_custom_call.1
$region0: #{tpu_custom_call.1}
  #allocation0 [shape = 'u32[]', space=smem, size = 0x4, offset = 0x4, fixed_abs, tag = 'smem constant byte address 0x4 - core index']
  #allocation1 [shape = 'u32[72,128]{1,0:T(1,128)}', space=vmem, size = 0x9000, scoped, tag = 'internal scratch']
  #allocation2 [shape = 'f32[1,1]{1,0:T(1,128)S(6)}', space=smem, size = 0x200, scoped, tag = 'scoped memory for tpu_custom_call.1']
  %s0 = inlined_call_operand.hbm [shape: f32[8,1024], index: 0, kind: input, shape index: {}]
  %s1 = inlined_call_operand.hbm [shape: bf16[1024,512], index: 1, kind: input, shape index: {}]
  %s2 = inlined_call_operand.hbm [shape: f32[1,512], index: 2, kind: input, shape index: {}]
  %s3 = inlined_call_operand.hbm [shape: bf16[512,512], index: 3, kind: input, shape index: {}]
  %s4 = inlined_call_operand.vmem [shape: f32[1,512], index: 4, kind: input, shape index: {}]
  %s5 = inlined_call_operand.hbm [shape: bf16[1,512], index: 5, kind: input, shape index: {}]
  %s6 = inlined_call_operand.<no memory space> [shape: f32[1,1], index: 6, kind: input, shape index: {}]
  %s7 = inlined_call_operand.vmem [shape: f32[8,1], index: 7, kind: output, shape index: {}]
  %s8 = sld [smem:[#allocation0]]
  $region58: #{tpu_custom_call.1} parent=0
    _
  %s10 = ssub.s32 1, %s8
  %s11 = scalar_select 0, %s10, %s8
  %12 = sst [smem:[#allocation2]] %s6
  $region1: #{tpu_custom_call.1} parent=0
    #allocation3 [shape = 'u8[32768]{0}', space=vmem, size = 0x8000, scoped, tag = 'input window, operand 0, single buffered']
    #allocation4 [shape = 's32[1]{0}', space=sflag, size = 0x4, scoped, tag = 'scoped memory for tpu_custom_call.1']
    #allocation5 [shape = 'u8[1048576]{0}', space=vmem, size = 0x100000, scoped, tag = 'input window, operand 1, single buffered']
    #allocation6 [shape = 's32[1]{0}', space=sflag, size = 0x4, scoped, tag = 'scoped memory for tpu_custom_call.1']
    #allocation7 [shape = 'u8[2048]{0}', space=vmem, size = 0x800, scoped, tag = 'input window, operand 2, single buffered']
    #allocation8 [shape = 'u8[524288]{0}', space=vmem, size = 0x80000, scoped, tag = 'input window, operand 3, single buffered']
    #allocation9 [shape = 's32[1]{0}', space=sflag, size = 0x4, scoped, tag = 'scoped memory for tpu_custom_call.1']
    #allocation10 [shape = 'u8[2048]{0}', space=vmem, size = 0x800, scoped, tag = 'input window, operand 5, single buffered']
    %13 = vsyncpa [#allocation4], 0
    %14 = vsyncpa [#allocation6], 0
    %15 = vsyncpa [#allocation9], 0
    // Predicated region
    $region2: #{tpu_custom_call.1} parent=1 // pred_check
      _
    $region3: #{tpu_custom_call.1} parent=1 // pred_check_branch
      %17 = sbr.rel (0) target = $region5
    $region4: #{tpu_custom_call.1} parent=1 // pred_region
      %19 = vsyncadd [#allocation4], 0
      %s21 = sshll.u32 %s0, 4
      %s22 = int_to_ptr.hbm [resolvable:$true] %s21
      %s23 = sshll.u32 [#allocation3], 4
      %s24 = int_to_ptr.vmem [resolvable:$true] %s23
      %26 = dma.hbm_to_vmem [thread:$0]  %s22, 1024, %s24, [#allocation4]
    $region5: #{tpu_custom_call.1} parent=1 // pred_fallthru
      _
    // Predicated region
    $region6: #{tpu_custom_call.1} parent=1 // pred_check
      _
    $region7: #{tpu_custom_call.1} parent=1 // pred_check_branch
      %28 = sbr.rel (0) target = $region9
    $region8: #{tpu_custom_call.1} parent=1 // pred_region
      %30 = vsyncadd [#allocation6], 0
      %s31 = sshll.u32 %s1, 4
      %s32 = int_to_ptr.hbm [resolvable:$true] %s31
      %s33 = sshll.u32 [#allocation5], 4
      %s34 = int_to_ptr.vmem [resolvable:$true] %s33
      %39 = dma.hbm_to_vmem [thread:$0]  %s32, 32768, %s34, [#allocation6], 256, 256, 16
    $region9: #{tpu_custom_call.1} parent=1 // pred_fallthru
      _
    // Predicated region
    $region10: #{tpu_custom_call.1} parent=1 // pred_check
      _
    $region11: #{tpu_custom_call.1} parent=1 // pred_check_branch
      %41 = sbr.rel (0) target = $region13
    $region12: #{tpu_custom_call.1} parent=1 // pred_region
      %43 = vsyncadd [#allocation6], 0
      %s45 = sshll.u32 %s2, 4
      %s46 = int_to_ptr.hbm [resolvable:$true] %s45
      %s47 = sshll.u32 [#allocation7], 4
      %s48 = int_to_ptr.vmem [resolvable:$true] %s47
      %50 = dma.hbm_to_vmem [thread:$0]  %s46, 64, %s48, [#allocation6]
    $region13: #{tpu_custom_call.1} parent=1 // pred_fallthru
      _
    // Predicated region
    $region14: #{tpu_custom_call.1} parent=1 // pred_check
      _
    $region15: #{tpu_custom_call.1} parent=1 // pred_check_branch
      %52 = sbr.rel (0) target = $region17
    $region16: #{tpu_custom_call.1} parent=1 // pred_region
      %54 = vsyncadd [#allocation9], 0
      %s55 = sshll.u32 %s3, 4
      %s56 = int_to_ptr.hbm [resolvable:$true] %s55
      %s57 = sshll.u32 [#allocation8], 4
      %s58 = int_to_ptr.vmem [resolvable:$true] %s57
      %63 = dma.hbm_to_vmem [thread:$0]  %s56, 16384, %s58, [#allocation9], 256, 256, 16
    $region17: #{tpu_custom_call.1} parent=1 // pred_fallthru
      _
    // Predicated region
    $region18: #{tpu_custom_call.1} parent=1 // pred_check
      _
    $region19: #{tpu_custom_call.1} parent=1 // pred_check_branch
      %65 = sbr.rel (0) target = $region21
    $region20: #{tpu_custom_call.1} parent=1 // pred_region
      _
    $region21: #{tpu_custom_call.1} parent=1 // pred_fallthru
      _
    // Predicated region
    $region22: #{tpu_custom_call.1} parent=1 // pred_check
      _
    $region23: #{tpu_custom_call.1} parent=1 // pred_check_branch
      %67 = sbr.rel (0) target = $region25
    $region24: #{tpu_custom_call.1} parent=1 // pred_region
      %69 = vsyncadd [#allocation9], 0
      %s71 = sshll.u32 %s5, 4
      %s72 = int_to_ptr.hbm [resolvable:$true] %s71
      %s73 = sshll.u32 [#allocation10], 4
      %s74 = int_to_ptr.vmem [resolvable:$true] %s73
      %76 = dma.hbm_to_vmem [thread:$0]  %s72, 64, %s74, [#allocation9]
    $region25: #{tpu_custom_call.1} parent=1 // pred_fallthru
      _
    // Predicated region
    $region26: #{tpu_custom_call.1} parent=1 // pred_check
      _
    $region27: #{tpu_custom_call.1} parent=1 // pred_check_branch
      %78 = sbr.rel (0) target = $region29
    $region28: #{tpu_custom_call.1} parent=1 // pred_region
      _
    $region29: #{tpu_custom_call.1} parent=1 // pred_fallthru
      _
    // Predicated region
    $region30: #{tpu_custom_call.1} parent=1 // pred_check
      _
    $region31: #{tpu_custom_call.1} parent=1 // pred_check_branch
      %80 = sbr.rel (0) target = $region33
    $region32: #{tpu_custom_call.1} parent=1 // pred_region
      %82 = dma.done [#allocation4], 1024
    $region33: #{tpu_custom_call.1} parent=1 // pred_fallthru
      _
    // Predicated region
    $region34: #{tpu_custom_call.1} parent=1 // pred_check
      _
    $region35: #{tpu_custom_call.1} parent=1 // pred_check_branch
      %84 = sbr.rel (0) target = $region37
    $region36: #{tpu_custom_call.1} parent=1 // pred_region
      %86 = dma.done [#allocation6], 32768
    $region37: #{tpu_custom_call.1} parent=1 // pred_fallthru
      _
    // Predicated region
    $region38: #{tpu_custom_call.1} parent=1 // pred_check
      _
    $region39: #{tpu_custom_call.1} parent=1 // pred_check_branch
      %88 = sbr.rel (0) target = $region41
    $region40: #{tpu_custom_call.1} parent=1 // pred_region
      %90 = dma.done [#allocation6], 64
    $region41: #{tpu_custom_call.1} parent=1 // pred_fallthru
      _
    // Predicated region
    $region42: #{tpu_custom_call.1} parent=1 // pred_check
      _
    $region43: #{tpu_custom_call.1} parent=1 // pred_check_branch
      %92 = sbr.rel (0) target = $region45
    $region44: #{tpu_custom_call.1} parent=1 // pred_region
      %94 = dma.done [#allocation9], 16384
    $region45: #{tpu_custom_call.1} parent=1 // pred_fallthru
      _
    // Predicated region
    $region46: #{tpu_custom_call.1} parent=1 // pred_check
      _
    $region47: #{tpu_custom_call.1} parent=1 // pred_check_branch
      %96 = sbr.rel (0) target = $region49
    $region48: #{tpu_custom_call.1} parent=1 // pred_region
      %98 = dma.done [#allocation9], 64
    $region49: #{tpu_custom_call.1} parent=1 // pred_fallthru
      _
    %v99 = vld [vmem:[#allocation3] sm:$0xff]
    %v100 = vld [vmem:[#allocation3 + $0x8] sm:$0xff]
    %v101 = vld [vmem:[#allocation3 + $0x10] sm:$0xff]
    %v102 = vld [vmem:[#allocation3 + $0x18] sm:$0xff]
    %v103 = vld [vmem:[#allocation3 + $0x20] sm:$0xff]
    %v104 = vld [vmem:[#allocation3 + $0x28] sm:$0xff]
    %v105 = vld [vmem:[#allocation3 + $0x30] sm:$0xff]
    %v106 = vld [vmem:[#allocation3 + $0x38] sm:$0xff]
    %v107 = vpack.c.bf16 %v99, %v99
    %v108 = vpack.c.bf16 %v100, %v100
    %v109 = vpack.c.bf16 %v101, %v101
    %v110 = vpack.c.bf16 %v102, %v102
    %v111 = vpack.c.bf16 %v103, %v103
    %v112 = vpack.c.bf16 %v104, %v104
    %v113 = vpack.c.bf16 %v105, %v105
    %v114 = vpack.c.bf16 %v106, %v106
    %v115 = vld [vmem:[#allocation5] sm:$0xff]
    %v116 = vld [vmem:[#allocation5 + $0x8] sm:$0xff]
    %v117 = vld [vmem:[#allocation5 + $0x10] sm:$0xff]
    %v118 = vld [vmem:[#allocation5 + $0x18] sm:$0xff]
    %v119 = vld [vmem:[#allocation5 + $0x20] sm:$0xff]
    %v120 = vld [vmem:[#allocation5 + $0x28] sm:$0xff]
    %v121 = vld [vmem:[#allocation5 + $0x30] sm:$0xff]
    %v122 = vld [vmem:[#allocation5 + $0x38] sm:$0xff]
    %v123 = vld [vmem:[#allocation5 + $0x40] sm:$0xff]
    %v124 = vld [vmem:[#allocation5 + $0x48] sm:$0xff]
    %v125 = vld [vmem:[#allocation5 + $0x50] sm:$0xff]
    %v126 = vld [vmem:[#allocation5 + $0x58] sm:$0xff]
    %v127 = vld [vmem:[#allocation5 + $0x60] sm:$0xff]
    %v128 = vld [vmem:[#allocation5 + $0x68] sm:$0xff]
    %v129 = vld [vmem:[#allocation5 + $0x70] sm:$0xff]
    %v130 = vld [vmem:[#allocation5 + $0x78] sm:$0xff]
    %v131 = vld [vmem:[#allocation5 + $0x80] sm:$0xff]
    %v132 = vld [vmem:[#allocation5 + $0x88] sm:$0xff]
    %v133 = vld [vmem:[#allocation5 + $0x90] sm:$0xff]
    %v134 = vld [vmem:[#allocation5 + $0x98] sm:$0xff]
    %v135 = vld [vmem:[#allocation5 + $0xa0] sm:$0xff]
    %v136 = vld [vmem:[#allocation5 + $0xa8] sm:$0xff]
    %v137 = vld [vmem:[#allocation5 + $0xb0] sm:$0xff]
    %v138 = vld [vmem:[#allocation5 + $0xb8] sm:$0xff]
    %v139 = vld [vmem:[#allocation5 + $0xc0] sm:$0xff]
    %v140 = vld [vmem:[#allocation5 + $0xc8] sm:$0xff]
    %v141 = vld [vmem:[#allocation5 + $0xd0] sm:$0xff]
    %v142 = vld [vmem:[#allocation5 + $0xd8] sm:$0xff]
    %v143 = vld [vmem:[#allocation5 + $0xe0] sm:$0xff]
    %v144 = vld [vmem:[#allocation5 + $0xe8] sm:$0xff]
    %v145 = vld [vmem:[#allocation5 + $0xf0] sm:$0xff]
    %v146 = vld [vmem:[#allocation5 + $0xf8] sm:$0xff]
    %v147 = vld [vmem:[#allocation5 + $0x100] sm:$0xff]
    %v148 = vld [vmem:[#allocation5 + $0x108] sm:$0xff]
    %v149 = vld [vmem:[#allocation5 + $0x110] sm:$0xff]
    %v150 = vld [vmem:[#allocation5 + $0x118] sm:$0xff]
    %v151 = vld [vmem:[#allocation5 + $0x120] sm:$0xff]
    %v152 = vld [vmem:[#allocation5 + $0x128] sm:$0xff]
    %v153 = vld [vmem:[#allocation5 + $0x130] sm:$0xff]
    %v154 = vld [vmem:[#allocation5 + $0x138] sm:$0xff]
    %v155 = vld [vmem:[#allocation5 + $0x140] sm:$0xff]
    %v156 = vld [vmem:[#allocation5 + $0x148] sm:$0xff]
    %v157 = vld [vmem:[#allocation5 + $0x150] sm:$0xff]
    %v158 = vld [vmem:[#allocation5 + $0x158] sm:$0xff]
    %v159 = vld [vmem:[#allocation5 + $0x160] sm:$0xff]
    %v160 = vld [vmem:[#allocation5 + $0x168] sm:$0xff]
    %v161 = vld [vmem:[#allocation5 + $0x170] sm:$0xff]
    %v162 = vld [vmem:[#allocation5 + $0x178] sm:$0xff]
    %v163 = vld [vmem:[#allocation5 + $0x180] sm:$0xff]
    %v164 = vld [vmem:[#allocation5 + $0x188] sm:$0xff]
    %v165 = vld [vmem:[#allocation5 + $0x190] sm:$0xff]
    %v166 = vld [vmem:[#allocation5 + $0x198] sm:$0xff]
    %v167 = vld [vmem:[#allocation5 + $0x1a0] sm:$0xff]
    %v168 = vld [vmem:[#allocation5 + $0x1a8] sm:$0xff]
    %v169 = vld [vmem:[#allocation5 + $0x1b0] sm:$0xff]
    %v170 = vld [vmem:[#allocation5 + $0x1b8] sm:$0xff]
    %v171 = vld [vmem:[#allocation5 + $0x1c0] sm:$0xff]
    %v172 = vld [vmem:[#allocation5 + $0x1c8] sm:$0xff]
    %v173 = vld [vmem:[#allocation5 + $0x1d0] sm:$0xff]
    %v174 = vld [vmem:[#allocation5 + $0x1d8] sm:$0xff]
    %v175 = vld [vmem:[#allocation5 + $0x1e0] sm:$0xff]
    %v176 = vld [vmem:[#allocation5 + $0x1e8] sm:$0xff]
    %v177 = vld [vmem:[#allocation5 + $0x1f0] sm:$0xff]
    %v178 = vld [vmem:[#allocation5 + $0x1f8] sm:$0xff]
    %v179 = vld [vmem:[#allocation5 + $0x200] sm:$0xff]
    %v180 = vld [vmem:[#allocation5 + $0x208] sm:$0xff]
    %v181 = vld [vmem:[#allocation5 + $0x210] sm:$0xff]
    %v182 = vld [vmem:[#allocation5 + $0x218] sm:$0xff]
    %v183 = vld [vmem:[#allocation5 + $0x220] sm:$0xff]
    %v184 = vld [vmem:[#allocation5 + $0x228] sm:$0xff]
    %v185 = vld [vmem:[#allocation5 + $0x230] sm:$0xff]
    %v186 = vld [vmem:[#allocation5 + $0x238] sm:$0xff]
    %v187 = vld [vmem:[#allocation5 + $0x240] sm:$0xff]
    %v188 = vld [vmem:[#allocation5 + $0x248] sm:$0xff]
    %v189 = vld [vmem:[#allocation5 + $0x250] sm:$0xff]
    %v190 = vld [vmem:[#allocation5 + $0x258] sm:$0xff]
    %v191 = vld [vmem:[#allocation5 + $0x260] sm:$0xff]
    %v192 = vld [vmem:[#allocation5 + $0x268] sm:$0xff]
    %v193 = vld [vmem:[#allocation5 + $0x270] sm:$0xff]
    %v194 = vld [vmem:[#allocation5 + $0x278] sm:$0xff]
    %v195 = vld [vmem:[#allocation5 + $0x280] sm:$0xff]
    %v196 = vld [vmem:[#allocation5 + $0x288] sm:$0xff]
    %v197 = vld [vmem:[#allocation5 + $0x290] sm:$0xff]
    %v198 = vld [vmem:[#allocation5 + $0x298] sm:$0xff]
    %v199 = vld [vmem:[#allocation5 + $0x2a0] sm:$0xff]
    %v200 = vld [vmem:[#allocation5 + $0x2a8] sm:$0xff]
    %v201 = vld [vmem:[#allocation5 + $0x2b0] sm:$0xff]
    %v202 = vld [vmem:[#allocation5 + $0x2b8] sm:$0xff]
    %v203 = vld [vmem:[#allocation5 + $0x2c0] sm:$0xff]
    %v204 = vld [vmem:[#allocation5 + $0x2c8] sm:$0xff]
    %v205 = vld [vmem:[#allocation5 + $0x2d0] sm:$0xff]
    %v206 = vld [vmem:[#allocation5 + $0x2d8] sm:$0xff]
    %v207 = vld [vmem:[#allocation5 + $0x2e0] sm:$0xff]
    %v208 = vld [vmem:[#allocation5 + $0x2e8] sm:$0xff]
    %v209 = vld [vmem:[#allocation5 + $0x2f0] sm:$0xff]
    %v210 = vld [vmem:[#allocation5 + $0x2f8] sm:$0xff]
    %v211 = vld [vmem:[#allocation5 + $0x300] sm:$0xff]
    %v212 = vld [vmem:[#allocation5 + $0x308] sm:$0xff]
    %v213 = vld [vmem:[#allocation5 + $0x310] sm:$0xff]
    %v214 = vld [vmem:[#allocation5 + $0x318] sm:$0xff]
    %v215 = vld [vmem:[#allocation5 + $0x320] sm:$0xff]
    %v216 = vld [vmem:[#allocation5 + $0x328] sm:$0xff]
    %v217 = vld [vmem:[#allocation5 + $0x330] sm:$0xff]
    %v218 = vld [vmem:[#allocation5 + $0x338] sm:$0xff]
    %v219 = vld [vmem:[#allocation5 + $0x340] sm:$0xff]
    %v220 = vld [vmem:[#allocation5 + $0x348] sm:$0xff]
    %v221 = vld [vmem:[#allocation5 + $0x350] sm:$0xff]
    %v222 = vld [vmem:[#allocation5 + $0x358] sm:$0xff]
    %v223 = vld [vmem:[#allocation5 + $0x360] sm:$0xff]
    %v224 = vld [vmem:[#allocation5 + $0x368] sm:$0xff]
    %v225 = vld [vmem:[#allocation5 + $0x370] sm:$0xff]
    %v226 = vld [vmem:[#allocation5 + $0x378] sm:$0xff]
    %v227 = vld [vmem:[#allocation5 + $0x380] sm:$0xff]
    %v228 = vld [vmem:[#allocation5 + $0x388] sm:$0xff]
    %v229 = vld [vmem:[#allocation5 + $0x390] sm:$0xff]
    %v230 = vld [vmem:[#allocation5 + $0x398] sm:$0xff]
    %v231 = vld [vmem:[#allocation5 + $0x3a0] sm:$0xff]
    %v232 = vld [vmem:[#allocation5 + $0x3a8] sm:$0xff]
    %v233 = vld [vmem:[#allocation5 + $0x3b0] sm:$0xff]
    %v234 = vld [vmem:[#allocation5 + $0x3b8] sm:$0xff]
    %v235 = vld [vmem:[#allocation5 + $0x3c0] sm:$0xff]
    %v236 = vld [vmem:[#allocation5 + $0x3c8] sm:$0xff]
    %v237 = vld [vmem:[#allocation5 + $0x3d0] sm:$0xff]
    %v238 = vld [vmem:[#allocation5 + $0x3d8] sm:$0xff]
    %v239 = vld [vmem:[#allocation5 + $0x3e0] sm:$0xff]
    %v240 = vld [vmem:[#allocation5 + $0x3e8] sm:$0xff]
    %v241 = vld [vmem:[#allocation5 + $0x3f0] sm:$0xff]
    %v242 = vld [vmem:[#allocation5 + $0x3f8] sm:$0xff]
    %v243 = vld [vmem:[#allocation5 + $0x400] sm:$0xff]
    %v244 = vld [vmem:[#allocation5 + $0x408] sm:$0xff]
    %v245 = vld [vmem:[#allocation5 + $0x410] sm:$0xff]
    %v246 = vld [vmem:[#allocation5 + $0x418] sm:$0xff]
    %v247 = vld [vmem:[#allocation5 + $0x420] sm:$0xff]
    %v248 = vld [vmem:[#allocation5 + $0x428] sm:$0xff]
    %v249 = vld [vmem:[#allocation5 + $0x430] sm:$0xff]
    %v250 = vld [vmem:[#allocation5 + $0x438] sm:$0xff]
    %v251 = vld [vmem:[#allocation5 + $0x440] sm:$0xff]
    %v252 = vld [vmem:[#allocation5 + $0x448] sm:$0xff]
    %v253 = vld [vmem:[#allocation5 + $0x450] sm:$0xff]
    %v254 = vld [vmem:[#allocation5 + $0x458] sm:$0xff]
    %v255 = vld [vmem:[#allocation5 + $0x460] sm:$0xff]
    %v256 = vld [vmem:[#allocation5 + $0x468] sm:$0xff]
    %v257 = vld [vmem:[#allocation5 + $0x470] sm:$0xff]
    %v258 = vld [vmem:[#allocation5 + $0x478] sm:$0xff]
    %v259 = vld [vmem:[#allocation5 + $0x480] sm:$0xff]
    %v260 = vld [vmem:[#allocation5 + $0x488] sm:$0xff]
    %v261 = vld [vmem:[#allocation5 + $0x490] sm:$0xff]
    %v262 = vld [vmem:[#allocation5 + $0x498] sm:$0xff]
    %v263 = vld [vmem:[#allocation5 + $0x4a0] sm:$0xff]
    %v264 = vld [vmem:[#allocation5 + $0x4a8] sm:$0xff]
    %v265 = vld [vmem:[#allocation5 + $0x4b0] sm:$0xff]
    %v266 = vld [vmem:[#allocation5 + $0x4b8] sm:$0xff]
    %v267 = vld [vmem:[#allocation5 + $0x4c0] sm:$0xff]
    %v268 = vld [vmem:[#allocation5 + $0x4c8] sm:$0xff]
    %v269 = vld [vmem:[#allocation5 + $0x4d0] sm:$0xff]
    %v270 = vld [vmem:[#allocation5 + $0x4d8] sm:$0xff]
    %v271 = vld [vmem:[#allocation5 + $0x4e0] sm:$0xff]
    %v272 = vld [vmem:[#allocation5 + $0x4e8] sm:$0xff]
    %v273 = vld [vmem:[#allocation5 + $0x4f0] sm:$0xff]
    %v274 = vld [vmem:[#allocation5 + $0x4f8] sm:$0xff]
    %v275 = vld [vmem:[#allocation5 + $0x500] sm:$0xff]
    %v276 = vld [vmem:[#allocation5 + $0x508] sm:$0xff]
    %v277 = vld [vmem:[#allocation5 + $0x510] sm:$0xff]
    %v278 = vld [vmem:[#allocation5 + $0x518] sm:$0xff]
    %v279 = vld [vmem:[#allocation5 + $0x520] sm:$0xff]
    %v280 = vld [vmem:[#allocation5 + $0x528] sm:$0xff]
    %v281 = vld [vmem:[#allocation5 + $0x530] sm:$0xff]
    %v282 = vld [vmem:[#allocation5 + $0x538] sm:$0xff]
    %v283 = vld [vmem:[#allocation5 + $0x540] sm:$0xff]
    %v284 = vld [vmem:[#allocation5 + $0x548] sm:$0xff]
    %v285 = vld [vmem:[#allocation5 + $0x550] sm:$0xff]
    %v286 = vld [vmem:[#allocation5 + $0x558] sm:$0xff]
    %v287 = vld [vmem:[#allocation5 + $0x560] sm:$0xff]
    %v288 = vld [vmem:[#allocation5 + $0x568] sm:$0xff]
    %v289 = vld [vmem:[#allocation5 + $0x570] sm:$0xff]
    %v290 = vld [vmem:[#allocation5 + $0x578] sm:$0xff]
    %v291 = vld [vmem:[#allocation5 + $0x580] sm:$0xff]
    %v292 = vld [vmem:[#allocation5 + $0x588] sm:$0xff]
    %v293 = vld [vmem:[#allocation5 + $0x590] sm:$0xff]
    %v294 = vld [vmem:[#allocation5 + $0x598] sm:$0xff]
    %v295 = vld [vmem:[#allocation5 + $0x5a0] sm:$0xff]
    %v296 = vld [vmem:[#allocation5 + $0x5a8] sm:$0xff]
    %v297 = vld [vmem:[#allocation5 + $0x5b0] sm:$0xff]
    %v298 = vld [vmem:[#allocation5 + $0x5b8] sm:$0xff]
    %v299 = vld [vmem:[#allocation5 + $0x5c0] sm:$0xff]
    %v300 = vld [vmem:[#allocation5 + $0x5c8] sm:$0xff]
    %v301 = vld [vmem:[#allocation5 + $0x5d0] sm:$0xff]
    %v302 = vld [vmem:[#allocation5 + $0x5d8] sm:$0xff]
    %v303 = vld [vmem:[#allocation5 + $0x5e0] sm:$0xff]
    %v304 = vld [vmem:[#allocation5 + $0x5e8] sm:$0xff]
    %v305 = vld [vmem:[#allocation5 + $0x5f0] sm:$0xff]
    %v306 = vld [vmem:[#allocation5 + $0x5f8] sm:$0xff]
    %v307 = vld [vmem:[#allocation5 + $0x600] sm:$0xff]
    %v308 = vld [vmem:[#allocation5 + $0x608] sm:$0xff]
    %v309 = vld [vmem:[#allocation5 + $0x610] sm:$0xff]
    %v310 = vld [vmem:[#allocation5 + $0x618] sm:$0xff]
    %v311 = vld [vmem:[#allocation5 + $0x620] sm:$0xff]
    %v312 = vld [vmem:[#allocation5 + $0x628] sm:$0xff]
    %v313 = vld [vmem:[#allocation5 + $0x630] sm:$0xff]
    %v314 = vld [vmem:[#allocation5 + $0x638] sm:$0xff]
    %v315 = vld [vmem:[#allocation5 + $0x640] sm:$0xff]
    %v316 = vld [vmem:[#allocation5 + $0x648] sm:$0xff]
    %v317 = vld [vmem:[#allocation5 + $0x650] sm:$0xff]
    %v318 = vld [vmem:[#allocation5 + $0x658] sm:$0xff]
    %v319 = vld [vmem:[#allocation5 + $0x660] sm:$0xff]
    %v320 = vld [vmem:[#allocation5 + $0x668] sm:$0xff]
    %v321 = vld [vmem:[#allocation5 + $0x670] sm:$0xff]
    %v322 = vld [vmem:[#allocation5 + $0x678] sm:$0xff]
    %v323 = vld [vmem:[#allocation5 + $0x680] sm:$0xff]
    %v324 = vld [vmem:[#allocation5 + $0x688] sm:$0xff]
    %v325 = vld [vmem:[#allocation5 + $0x690] sm:$0xff]
    %v326 = vld [vmem:[#allocation5 + $0x698] sm:$0xff]
    %v327 = vld [vmem:[#allocation5 + $0x6a0] sm:$0xff]
    %v328 = vld [vmem:[#allocation5 + $0x6a8] sm:$0xff]
    %v329 = vld [vmem:[#allocation5 + $0x6b0] sm:$0xff]
    %v330 = vld [vmem:[#allocation5 + $0x6b8] sm:$0xff]
    %v331 = vld [vmem:[#allocation5 + $0x6c0] sm:$0xff]
    %v332 = vld [vmem:[#allocation5 + $0x6c8] sm:$0xff]
    %v333 = vld [vmem:[#allocation5 + $0x6d0] sm:$0xff]
    %v334 = vld [vmem:[#allocation5 + $0x6d8] sm:$0xff]
    %v335 = vld [vmem:[#allocation5 + $0x6e0] sm:$0xff]
    %v336 = vld [vmem:[#allocation5 + $0x6e8] sm:$0xff]
    %v337 = vld [vmem:[#allocation5 + $0x6f0] sm:$0xff]
    %v338 = vld [vmem:[#allocation5 + $0x6f8] sm:$0xff]
    %v339 = vld [vmem:[#allocation5 + $0x700] sm:$0xff]
    %v340 = vld [vmem:[#allocation5 + $0x708] sm:$0xff]
    %v341 = vld [vmem:[#allocation5 + $0x710] sm:$0xff]
    %v342 = vld [vmem:[#allocation5 + $0x718] sm:$0xff]
    %v343 = vld [vmem:[#allocation5 + $0x720] sm:$0xff]
    %v344 = vld [vmem:[#allocation5 + $0x728] sm:$0xff]
    %v345 = vld [vmem:[#allocation5 + $0x730] sm:$0xff]
    %v346 = vld [vmem:[#allocation5 + $0x738] sm:$0xff]
    %v347 = vld [vmem:[#allocation5 + $0x740] sm:$0xff]
    %v348 = vld [vmem:[#allocation5 + $0x748] sm:$0xff]
    %v349 = vld [vmem:[#allocation5 + $0x750] sm:$0xff]
    %v350 = vld [vmem:[#allocation5 + $0x758] sm:$0xff]
    %v351 = vld [vmem:[#allocation5 + $0x760] sm:$0xff]
    %v352 = vld [vmem:[#allocation5 + $0x768] sm:$0xff]
    %v353 = vld [vmem:[#allocation5 + $0x770] sm:$0xff]
    %v354 = vld [vmem:[#allocation5 + $0x778] sm:$0xff]
    %v355 = vld [vmem:[#allocation5 + $0x780] sm:$0xff]
    %v356 = vld [vmem:[#allocation5 + $0x788] sm:$0xff]
    %v357 = vld [vmem:[#allocation5 + $0x790] sm:$0xff]
    %v358 = vld [vmem:[#allocation5 + $0x798] sm:$0xff]
    %v359 = vld [vmem:[#allocation5 + $0x7a0] sm:$0xff]
    %v360 = vld [vmem:[#allocation5 + $0x7a8] sm:$0xff]
    %v361 = vld [vmem:[#allocation5 + $0x7b0] sm:$0xff]
    %v362 = vld [vmem:[#allocation5 + $0x7b8] sm:$0xff]
    %v363 = vld [vmem:[#allocation5 + $0x7c0] sm:$0xff]
    %v364 = vld [vmem:[#allocation5 + $0x7c8] sm:$0xff]
    %v365 = vld [vmem:[#allocation5 + $0x7d0] sm:$0xff]
    %v366 = vld [vmem:[#allocation5 + $0x7d8] sm:$0xff]
    %v367 = vld [vmem:[#allocation5 + $0x7e0] sm:$0xff]
    %v368 = vld [vmem:[#allocation5 + $0x7e8] sm:$0xff]
    %v369 = vld [vmem:[#allocation5 + $0x7f0] sm:$0xff]
    %v370 = vld [vmem:[#allocation5 + $0x7f8] sm:$0xff]
    %v371 = vld [vmem:[#allocation7] sm:$0xf]
    %v373 = vperm.slane %v371, 0
    %v374 = vperm.slane %v371, 1
    %v375 = vperm.slane %v371, 2
    %v376 = vperm.slane %v371, 3
    %v637 = vunpack.c.l.b16 %v115
    %v638 = vunpack.c.h.b16 %v115
    %v639 = vunpack.c.l.b16 %v116
    %v640 = vunpack.c.h.b16 %v116
    %v641 = vunpack.c.l.b16 %v117
    %v642 = vunpack.c.h.b16 %v117
    %v643 = vunpack.c.l.b16 %v118
    %v644 = vunpack.c.h.b16 %v118
    %v645 = vunpack.c.l.b16 %v119
    %v646 = vunpack.c.h.b16 %v119
    %v647 = vunpack.c.l.b16 %v120
    %v648 = vunpack.c.h.b16 %v120
    %v649 = vunpack.c.l.b16 %v121
    %v650 = vunpack.c.h.b16 %v121
    %v651 = vunpack.c.l.b16 %v122
    %v652 = vunpack.c.h.b16 %v122
    %v653 = vunpack.c.l.b16 %v123
    %v654 = vunpack.c.h.b16 %v123
    %v655 = vunpack.c.l.b16 %v124
    %v656 = vunpack.c.h.b16 %v124
    %v657 = vunpack.c.l.b16 %v125
    %v658 = vunpack.c.h.b16 %v125
    %v659 = vunpack.c.l.b16 %v126
    %v660 = vunpack.c.h.b16 %v126
    %v661 = vunpack.c.l.b16 %v127
    %v662 = vunpack.c.h.b16 %v127
    %v663 = vunpack.c.l.b16 %v128
    %v664 = vunpack.c.h.b16 %v128
    %v665 = vunpack.c.l.b16 %v129
    %v666 = vunpack.c.h.b16 %v129
    %v667 = vunpack.c.l.b16 %v130
    %v668 = vunpack.c.h.b16 %v130
    %v669 = vunpack.c.l.b16 %v131
    %v670 = vunpack.c.h.b16 %v131
    %v671 = vunpack.c.l.b16 %v132
    %v672 = vunpack.c.h.b16 %v132
    %v673 = vunpack.c.l.b16 %v133
    %v674 = vunpack.c.h.b16 %v133
    %v675 = vunpack.c.l.b16 %v134
    %v676 = vunpack.c.h.b16 %v134
    %v677 = vunpack.c.l.b16 %v135
    %v678 = vunpack.c.h.b16 %v135
    %v679 = vunpack.c.l.b16 %v136
    %v680 = vunpack.c.h.b16 %v136
    %v681 = vunpack.c.l.b16 %v137
    %v682 = vunpack.c.h.b16 %v137
    %v683 = vunpack.c.l.b16 %v138
    %v684 = vunpack.c.h.b16 %v138
    %v685 = vunpack.c.l.b16 %v139
    %v686 = vunpack.c.h.b16 %v139
    %v687 = vunpack.c.l.b16 %v140
    %v688 = vunpack.c.h.b16 %v140
    %v689 = vunpack.c.l.b16 %v141
    %v690 = vunpack.c.h.b16 %v141
    %v691 = vunpack.c.l.b16 %v142
    %v692 = vunpack.c.h.b16 %v142
    %v693 = vunpack.c.l.b16 %v143
    %v694 = vunpack.c.h.b16 %v143
    %v695 = vunpack.c.l.b16 %v144
    %v696 = vunpack.c.h.b16 %v144
    %v697 = vunpack.c.l.b16 %v145
    %v698 = vunpack.c.h.b16 %v145
    %v699 = vunpack.c.l.b16 %v146
    %v700 = vunpack.c.h.b16 %v146
    %v701 = vunpack.c.l.b16 %v147
    %v702 = vunpack.c.h.b16 %v147
    %v703 = vunpack.c.l.b16 %v148
    %v704 = vunpack.c.h.b16 %v148
    %v705 = vunpack.c.l.b16 %v149
    %v706 = vunpack.c.h.b16 %v149
    %v707 = vunpack.c.l.b16 %v150
    %v708 = vunpack.c.h.b16 %v150
    %v709 = vunpack.c.l.b16 %v151
    %v710 = vunpack.c.h.b16 %v151
    %v711 = vunpack.c.l.b16 %v152
    %v712 = vunpack.c.h.b16 %v152
    %v713 = vunpack.c.l.b16 %v153
    %v714 = vunpack.c.h.b16 %v153
    %v715 = vunpack.c.l.b16 %v154
    %v716 = vunpack.c.h.b16 %v154
    %v717 = vunpack.c.l.b16 %v155
    %v718 = vunpack.c.h.b16 %v155
    %v719 = vunpack.c.l.b16 %v156
    %v720 = vunpack.c.h.b16 %v156
    %v721 = vunpack.c.l.b16 %v157
    %v722 = vunpack.c.h.b16 %v157
    %v723 = vunpack.c.l.b16 %v158
    %v724 = vunpack.c.h.b16 %v158
    %v725 = vunpack.c.l.b16 %v159
    %v726 = vunpack.c.h.b16 %v159
    %v727 = vunpack.c.l.b16 %v160
    %v728 = vunpack.c.h.b16 %v160
    %v729 = vunpack.c.l.b16 %v161
    %v730 = vunpack.c.h.b16 %v161
    %v731 = vunpack.c.l.b16 %v162
    %v732 = vunpack.c.h.b16 %v162
    %v733 = vunpack.c.l.b16 %v163
    %v734 = vunpack.c.h.b16 %v163
    %v735 = vunpack.c.l.b16 %v164
    %v736 = vunpack.c.h.b16 %v164
    %v737 = vunpack.c.l.b16 %v165
    %v738 = vunpack.c.h.b16 %v165
    %v739 = vunpack.c.l.b16 %v166
    %v740 = vunpack.c.h.b16 %v166
    %v741 = vunpack.c.l.b16 %v167
    %v742 = vunpack.c.h.b16 %v167
    %v743 = vunpack.c.l.b16 %v168
    %v744 = vunpack.c.h.b16 %v168
    %v745 = vunpack.c.l.b16 %v169
    %v746 = vunpack.c.h.b16 %v169
    %v747 = vunpack.c.l.b16 %v170
    %v748 = vunpack.c.h.b16 %v170
    %v749 = vunpack.c.l.b16 %v171
    %v750 = vunpack.c.h.b16 %v171
    %v751 = vunpack.c.l.b16 %v172
    %v752 = vunpack.c.h.b16 %v172
    %v753 = vunpack.c.l.b16 %v173
    %v754 = vunpack.c.h.b16 %v173
    %v755 = vunpack.c.l.b16 %v174
    %v756 = vunpack.c.h.b16 %v174
    %v757 = vunpack.c.l.b16 %v175
    %v758 = vunpack.c.h.b16 %v175
    %v759 = vunpack.c.l.b16 %v176
    %v760 = vunpack.c.h.b16 %v176
    %v761 = vunpack.c.l.b16 %v177
    %v762 = vunpack.c.h.b16 %v177
    %v763 = vunpack.c.l.b16 %v178
    %v764 = vunpack.c.h.b16 %v178
    %v765 = vunpack.c.l.b16 %v179
    %v766 = vunpack.c.h.b16 %v179
    %v767 = vunpack.c.l.b16 %v180
    %v768 = vunpack.c.h.b16 %v180
    %v769 = vunpack.c.l.b16 %v181
    %v770 = vunpack.c.h.b16 %v181
    %v771 = vunpack.c.l.b16 %v182
    %v772 = vunpack.c.h.b16 %v182
    %v773 = vunpack.c.l.b16 %v183
    %v774 = vunpack.c.h.b16 %v183
    %v775 = vunpack.c.l.b16 %v184
    %v776 = vunpack.c.h.b16 %v184
    %v777 = vunpack.c.l.b16 %v185
    %v778 = vunpack.c.h.b16 %v185
    %v779 = vunpack.c.l.b16 %v186
    %v780 = vunpack.c.h.b16 %v186
    %v781 = vunpack.c.l.b16 %v187
    %v782 = vunpack.c.h.b16 %v187
    %v783 = vunpack.c.l.b16 %v188
    %v784 = vunpack.c.h.b16 %v188
    %v785 = vunpack.c.l.b16 %v189
    %v786 = vunpack.c.h.b16 %v189
    %v787 = vunpack.c.l.b16 %v190
    %v788 = vunpack.c.h.b16 %v190
    %v789 = vunpack.c.l.b16 %v191
    %v790 = vunpack.c.h.b16 %v191
    %v791 = vunpack.c.l.b16 %v192
    %v792 = vunpack.c.h.b16 %v192
    %v793 = vunpack.c.l.b16 %v193
    %v794 = vunpack.c.h.b16 %v193
    %v795 = vunpack.c.l.b16 %v194
    %v796 = vunpack.c.h.b16 %v194
    %v797 = vunpack.c.l.b16 %v195
    %v798 = vunpack.c.h.b16 %v195
    %v799 = vunpack.c.l.b16 %v196
    %v800 = vunpack.c.h.b16 %v196
    %v801 = vunpack.c.l.b16 %v197
    %v802 = vunpack.c.h.b16 %v197
    %v803 = vunpack.c.l.b16 %v198
    %v804 = vunpack.c.h.b16 %v198
    %v805 = vunpack.c.l.b16 %v199
    %v806 = vunpack.c.h.b16 %v199
    %v807 = vunpack.c.l.b16 %v200
    %v808 = vunpack.c.h.b16 %v200
    %v809 = vunpack.c.l.b16 %v201
    %v810 = vunpack.c.h.b16 %v201
    %v811 = vunpack.c.l.b16 %v202
    %v812 = vunpack.c.h.b16 %v202
    %v813 = vunpack.c.l.b16 %v203
    %v814 = vunpack.c.h.b16 %v203
    %v815 = vunpack.c.l.b16 %v204
    %v816 = vunpack.c.h.b16 %v204
    %v817 = vunpack.c.l.b16 %v205
    %v818 = vunpack.c.h.b16 %v205
    %v819 = vunpack.c.l.b16 %v206
    %v820 = vunpack.c.h.b16 %v206
    %v821 = vunpack.c.l.b16 %v207
    %v822 = vunpack.c.h.b16 %v207
    %v823 = vunpack.c.l.b16 %v208
    %v824 = vunpack.c.h.b16 %v208
    %v825 = vunpack.c.l.b16 %v209
    %v826 = vunpack.c.h.b16 %v209
    %v827 = vunpack.c.l.b16 %v210
    %v828 = vunpack.c.h.b16 %v210
    %v829 = vunpack.c.l.b16 %v211
    %v830 = vunpack.c.h.b16 %v211
    %v831 = vunpack.c.l.b16 %v212
    %v832 = vunpack.c.h.b16 %v212
    %v833 = vunpack.c.l.b16 %v213
    %v834 = vunpack.c.h.b16 %v213
    %v835 = vunpack.c.l.b16 %v214
    %v836 = vunpack.c.h.b16 %v214
    %v837 = vunpack.c.l.b16 %v215
    %v838 = vunpack.c.h.b16 %v215
    %v839 = vunpack.c.l.b16 %v216
    %v840 = vunpack.c.h.b16 %v216
    %v841 = vunpack.c.l.b16 %v217
    %v842 = vunpack.c.h.b16 %v217
    %v843 = vunpack.c.l.b16 %v218
    %v844 = vunpack.c.h.b16 %v218
    %v845 = vunpack.c.l.b16 %v219
    %v846 = vunpack.c.h.b16 %v219
    %v847 = vunpack.c.l.b16 %v220
    %v848 = vunpack.c.h.b16 %v220
    %v849 = vunpack.c.l.b16 %v221
    %v850 = vunpack.c.h.b16 %v221
    %v851 = vunpack.c.l.b16 %v222
    %v852 = vunpack.c.h.b16 %v222
    %v853 = vunpack.c.l.b16 %v223
    %v854 = vunpack.c.h.b16 %v223
    %v855 = vunpack.c.l.b16 %v224
    %v856 = vunpack.c.h.b16 %v224
    %v857 = vunpack.c.l.b16 %v225
    %v858 = vunpack.c.h.b16 %v225
    %v859 = vunpack.c.l.b16 %v226
    %v860 = vunpack.c.h.b16 %v226
    %v861 = vunpack.c.l.b16 %v227
    %v862 = vunpack.c.h.b16 %v227
    %v863 = vunpack.c.l.b16 %v228
    %v864 = vunpack.c.h.b16 %v228
    %v865 = vunpack.c.l.b16 %v229
    %v866 = vunpack.c.h.b16 %v229
    %v867 = vunpack.c.l.b16 %v230
    %v868 = vunpack.c.h.b16 %v230
    %v869 = vunpack.c.l.b16 %v231
    %v870 = vunpack.c.h.b16 %v231
    %v871 = vunpack.c.l.b16 %v232
    %v872 = vunpack.c.h.b16 %v232
    %v873 = vunpack.c.l.b16 %v233
    %v874 = vunpack.c.h.b16 %v233
    %v875 = vunpack.c.l.b16 %v234
    %v876 = vunpack.c.h.b16 %v234
    %v877 = vunpack.c.l.b16 %v235
    %v878 = vunpack.c.h.b16 %v235
    %v879 = vunpack.c.l.b16 %v236
    %v880 = vunpack.c.h.b16 %v236
    %v881 = vunpack.c.l.b16 %v237
    %v882 = vunpack.c.h.b16 %v237
    %v883 = vunpack.c.l.b16 %v238
    %v884 = vunpack.c.h.b16 %v238
    %v885 = vunpack.c.l.b16 %v239
    %v886 = vunpack.c.h.b16 %v239
    %v887 = vunpack.c.l.b16 %v240
    %v888 = vunpack.c.h.b16 %v240
    %v889 = vunpack.c.l.b16 %v241
    %v890 = vunpack.c.h.b16 %v241
    %v891 = vunpack.c.l.b16 %v242
    %v892 = vunpack.c.h.b16 %v242
    %v893 = vunpack.c.l.b16 %v243
    %v894 = vunpack.c.h.b16 %v243
    %v895 = vunpack.c.l.b16 %v244
    %v896 = vunpack.c.h.b16 %v244
    %v897 = vunpack.c.l.b16 %v245
    %v898 = vunpack.c.h.b16 %v245
    %v899 = vunpack.c.l.b16 %v246
    %v900 = vunpack.c.h.b16 %v246
    %v901 = vunpack.c.l.b16 %v247
    %v902 = vunpack.c.h.b16 %v247
    %v903 = vunpack.c.l.b16 %v248
    %v904 = vunpack.c.h.b16 %v248
    %v905 = vunpack.c.l.b16 %v249
    %v906 = vunpack.c.h.b16 %v249
    %v907 = vunpack.c.l.b16 %v250
    %v908 = vunpack.c.h.b16 %v250
    %v909 = vunpack.c.l.b16 %v251
    %v910 = vunpack.c.h.b16 %v251
    %v911 = vunpack.c.l.b16 %v252
    %v912 = vunpack.c.h.b16 %v252
    %v913 = vunpack.c.l.b16 %v253
    %v914 = vunpack.c.h.b16 %v253
    %v915 = vunpack.c.l.b16 %v254
    %v916 = vunpack.c.h.b16 %v254
    %v917 = vunpack.c.l.b16 %v255
    %v918 = vunpack.c.h.b16 %v255
    %v919 = vunpack.c.l.b16 %v256
    %v920 = vunpack.c.h.b16 %v256
    %v921 = vunpack.c.l.b16 %v257
    %v922 = vunpack.c.h.b16 %v257
    %v923 = vunpack.c.l.b16 %v258
    %v924 = vunpack.c.h.b16 %v258
    %v925 = vunpack.c.l.b16 %v259
    %v926 = vunpack.c.h.b16 %v259
    %v927 = vunpack.c.l.b16 %v260
    %v928 = vunpack.c.h.b16 %v260
    %v929 = vunpack.c.l.b16 %v261
    %v930 = vunpack.c.h.b16 %v261
    %v931 = vunpack.c.l.b16 %v262
    %v932 = vunpack.c.h.b16 %v262
    %v933 = vunpack.c.l.b16 %v263
    %v934 = vunpack.c.h.b16 %v263
    %v935 = vunpack.c.l.b16 %v264
    %v936 = vunpack.c.h.b16 %v264
    %v937 = vunpack.c.l.b16 %v265
    %v938 = vunpack.c.h.b16 %v265
    %v939 = vunpack.c.l.b16 %v266
    %v940 = vunpack.c.h.b16 %v266
    %v941 = vunpack.c.l.b16 %v267
    %v942 = vunpack.c.h.b16 %v267
    %v943 = vunpack.c.l.b16 %v268
    %v944 = vunpack.c.h.b16 %v268
    %v945 = vunpack.c.l.b16 %v269
    %v946 = vunpack.c.h.b16 %v269
    %v947 = vunpack.c.l.b16 %v270
    %v948 = vunpack.c.h.b16 %v270
    %v949 = vunpack.c.l.b16 %v271
    %v950 = vunpack.c.h.b16 %v271
    %v951 = vunpack.c.l.b16 %v272
    %v952 = vunpack.c.h.b16 %v272
    %v953 = vunpack.c.l.b16 %v273
    %v954 = vunpack.c.h.b16 %v273
    %v955 = vunpack.c.l.b16 %v274
    %v956 = vunpack.c.h.b16 %v274
    %v957 = vunpack.c.l.b16 %v275
    %v958 = vunpack.c.h.b16 %v275
    %v959 = vunpack.c.l.b16 %v276
    %v960 = vunpack.c.h.b16 %v276
    %v961 = vunpack.c.l.b16 %v277
    %v962 = vunpack.c.h.b16 %v277
    %v963 = vunpack.c.l.b16 %v278
    %v964 = vunpack.c.h.b16 %v278
    %v965 = vunpack.c.l.b16 %v279
    %v966 = vunpack.c.h.b16 %v279
    %v967 = vunpack.c.l.b16 %v280
    %v968 = vunpack.c.h.b16 %v280
    %v969 = vunpack.c.l.b16 %v281
    %v970 = vunpack.c.h.b16 %v281
    %v971 = vunpack.c.l.b16 %v282
    %v972 = vunpack.c.h.b16 %v282
    %v973 = vunpack.c.l.b16 %v283
    %v974 = vunpack.c.h.b16 %v283
    %v975 = vunpack.c.l.b16 %v284
    %v976 = vunpack.c.h.b16 %v284
    %v977 = vunpack.c.l.b16 %v285
    %v978 = vunpack.c.h.b16 %v285
    %v979 = vunpack.c.l.b16 %v286
    %v980 = vunpack.c.h.b16 %v286
    %v981 = vunpack.c.l.b16 %v287
    %v982 = vunpack.c.h.b16 %v287
    %v983 = vunpack.c.l.b16 %v288
    %v984 = vunpack.c.h.b16 %v288
    %v985 = vunpack.c.l.b16 %v289
    %v986 = vunpack.c.h.b16 %v289
    %v987 = vunpack.c.l.b16 %v290
    %v988 = vunpack.c.h.b16 %v290
    %v989 = vunpack.c.l.b16 %v291
    %v990 = vunpack.c.h.b16 %v291
    %v991 = vunpack.c.l.b16 %v292
    %v992 = vunpack.c.h.b16 %v292
    %v993 = vunpack.c.l.b16 %v293
    %v994 = vunpack.c.h.b16 %v293
    %v995 = vunpack.c.l.b16 %v294
    %v996 = vunpack.c.h.b16 %v294
    %v997 = vunpack.c.l.b16 %v295
    %v998 = vunpack.c.h.b16 %v295
    %v999 = vunpack.c.l.b16 %v296
    %v1000 = vunpack.c.h.b16 %v296
    %v1001 = vunpack.c.l.b16 %v297
    %v1002 = vunpack.c.h.b16 %v297
    %v1003 = vunpack.c.l.b16 %v298
    %v1004 = vunpack.c.h.b16 %v298
    %v1005 = vunpack.c.l.b16 %v299
    %v1006 = vunpack.c.h.b16 %v299
    %v1007 = vunpack.c.l.b16 %v300
    %v1008 = vunpack.c.h.b16 %v300
    %v1009 = vunpack.c.l.b16 %v301
    %v1010 = vunpack.c.h.b16 %v301
    %v1011 = vunpack.c.l.b16 %v302
    %v1012 = vunpack.c.h.b16 %v302
    %v1013 = vunpack.c.l.b16 %v303
    %v1014 = vunpack.c.h.b16 %v303
    %v1015 = vunpack.c.l.b16 %v304
    %v1016 = vunpack.c.h.b16 %v304
    %v1017 = vunpack.c.l.b16 %v305
    %v1018 = vunpack.c.h.b16 %v305
    %v1019 = vunpack.c.l.b16 %v306
    %v1020 = vunpack.c.h.b16 %v306
    %v1021 = vunpack.c.l.b16 %v307
    %v1022 = vunpack.c.h.b16 %v307
    %v1023 = vunpack.c.l.b16 %v308
    %v1024 = vunpack.c.h.b16 %v308
    %v1025 = vunpack.c.l.b16 %v309
    %v1026 = vunpack.c.h.b16 %v309
    %v1027 = vunpack.c.l.b16 %v310
    %v1028 = vunpack.c.h.b16 %v310
    %v1029 = vunpack.c.l.b16 %v311
    %v1030 = vunpack.c.h.b16 %v311
    %v1031 = vunpack.c.l.b16 %v312
    %v1032 = vunpack.c.h.b16 %v312
    %v1033 = vunpack.c.l.b16 %v313
    %v1034 = vunpack.c.h.b16 %v313
    %v1035 = vunpack.c.l.b16 %v314
    %v1036 = vunpack.c.h.b16 %v314
    %v1037 = vunpack.c.l.b16 %v315
    %v1038 = vunpack.c.h.b16 %v315
    %v1039 = vunpack.c.l.b16 %v316
    %v1040 = vunpack.c.h.b16 %v316
    %v1041 = vunpack.c.l.b16 %v317
    %v1042 = vunpack.c.h.b16 %v317
    %v1043 = vunpack.c.l.b16 %v318
    %v1044 = vunpack.c.h.b16 %v318
    %v1045 = vunpack.c.l.b16 %v319
    %v1046 = vunpack.c.h.b16 %v319
    %v1047 = vunpack.c.l.b16 %v320
    %v1048 = vunpack.c.h.b16 %v320
    %v1049 = vunpack.c.l.b16 %v321
    %v1050 = vunpack.c.h.b16 %v321
    %v1051 = vunpack.c.l.b16 %v322
    %v1052 = vunpack.c.h.b16 %v322
    %v1053 = vunpack.c.l.b16 %v323
    %v1054 = vunpack.c.h.b16 %v323
    %v1055 = vunpack.c.l.b16 %v324
    %v1056 = vunpack.c.h.b16 %v324
    %v1057 = vunpack.c.l.b16 %v325
    %v1058 = vunpack.c.h.b16 %v325
    %v1059 = vunpack.c.l.b16 %v326
    %v1060 = vunpack.c.h.b16 %v326
    %v1061 = vunpack.c.l.b16 %v327
    %v1062 = vunpack.c.h.b16 %v327
    %v1063 = vunpack.c.l.b16 %v328
    %v1064 = vunpack.c.h.b16 %v328
    %v1065 = vunpack.c.l.b16 %v329
    %v1066 = vunpack.c.h.b16 %v329
    %v1067 = vunpack.c.l.b16 %v330
    %v1068 = vunpack.c.h.b16 %v330
    %v1069 = vunpack.c.l.b16 %v331
    %v1070 = vunpack.c.h.b16 %v331
    %v1071 = vunpack.c.l.b16 %v332
    %v1072 = vunpack.c.h.b16 %v332
    %v1073 = vunpack.c.l.b16 %v333
    %v1074 = vunpack.c.h.b16 %v333
    %v1075 = vunpack.c.l.b16 %v334
    %v1076 = vunpack.c.h.b16 %v334
    %v1077 = vunpack.c.l.b16 %v335
    %v1078 = vunpack.c.h.b16 %v335
    %v1079 = vunpack.c.l.b16 %v336
    %v1080 = vunpack.c.h.b16 %v336
    %v1081 = vunpack.c.l.b16 %v337
    %v1082 = vunpack.c.h.b16 %v337
    %v1083 = vunpack.c.l.b16 %v338
    %v1084 = vunpack.c.h.b16 %v338
    %v1085 = vunpack.c.l.b16 %v339
    %v1086 = vunpack.c.h.b16 %v339
    %v1087 = vunpack.c.l.b16 %v340
    %v1088 = vunpack.c.h.b16 %v340
    %v1089 = vunpack.c.l.b16 %v341
    %v1090 = vunpack.c.h.b16 %v341
    %v1091 = vunpack.c.l.b16 %v342
    %v1092 = vunpack.c.h.b16 %v342
    %v1093 = vunpack.c.l.b16 %v343
    %v1094 = vunpack.c.h.b16 %v343
    %v1095 = vunpack.c.l.b16 %v344
    %v1096 = vunpack.c.h.b16 %v344
    %v1097 = vunpack.c.l.b16 %v345
    %v1098 = vunpack.c.h.b16 %v345
    %v1099 = vunpack.c.l.b16 %v346
    %v1100 = vunpack.c.h.b16 %v346
    %v1101 = vunpack.c.l.b16 %v347
    %v1102 = vunpack.c.h.b16 %v347
    %v1103 = vunpack.c.l.b16 %v348
    %v1104 = vunpack.c.h.b16 %v348
    %v1105 = vunpack.c.l.b16 %v349
    %v1106 = vunpack.c.h.b16 %v349
    %v1107 = vunpack.c.l.b16 %v350
    %v1108 = vunpack.c.h.b16 %v350
    %v1109 = vunpack.c.l.b16 %v351
    %v1110 = vunpack.c.h.b16 %v351
    %v1111 = vunpack.c.l.b16 %v352
    %v1112 = vunpack.c.h.b16 %v352
    %v1113 = vunpack.c.l.b16 %v353
    %v1114 = vunpack.c.h.b16 %v353
    %v1115 = vunpack.c.l.b16 %v354
    %v1116 = vunpack.c.h.b16 %v354
    %v1117 = vunpack.c.l.b16 %v355
    %v1118 = vunpack.c.h.b16 %v355
    %v1119 = vunpack.c.l.b16 %v356
    %v1120 = vunpack.c.h.b16 %v356
    %v1121 = vunpack.c.l.b16 %v357
    %v1122 = vunpack.c.h.b16 %v357
    %v1123 = vunpack.c.l.b16 %v358
    %v1124 = vunpack.c.h.b16 %v358
    %v1125 = vunpack.c.l.b16 %v359
    %v1126 = vunpack.c.h.b16 %v359
    %v1127 = vunpack.c.l.b16 %v360
    %v1128 = vunpack.c.h.b16 %v360
    %v1129 = vunpack.c.l.b16 %v361
    %v1130 = vunpack.c.h.b16 %v361
    %v1131 = vunpack.c.l.b16 %v362
    %v1132 = vunpack.c.h.b16 %v362
    %v1133 = vunpack.c.l.b16 %v363
    %v1134 = vunpack.c.h.b16 %v363
    %v1135 = vunpack.c.l.b16 %v364
    %v1136 = vunpack.c.h.b16 %v364
    %v1137 = vunpack.c.l.b16 %v365
    %v1138 = vunpack.c.h.b16 %v365
    %v1139 = vunpack.c.l.b16 %v366
    %v1140 = vunpack.c.h.b16 %v366
    %v1141 = vunpack.c.l.b16 %v367
    %v1142 = vunpack.c.h.b16 %v367
    %v1143 = vunpack.c.l.b16 %v368
    %v1144 = vunpack.c.h.b16 %v368
    %v1145 = vunpack.c.l.b16 %v369
    %v1146 = vunpack.c.h.b16 %v369
    %v1147 = vunpack.c.l.b16 %v370
    %v1148 = vunpack.c.h.b16 %v370
    %v1149 = vpack.c.b16 %v641, %v637
    %v1150 = vpack.c.b16 %v642, %v638
    %v1151 = vpack.c.b16 %v643, %v639
    %v1152 = vpack.c.b16 %v644, %v640
    %v1153 = vpack.c.b16 %v649, %v645
    %v1154 = vpack.c.b16 %v650, %v646
    %v1155 = vpack.c.b16 %v651, %v647
    %v1156 = vpack.c.b16 %v652, %v648
    %v1157 = vpack.c.b16 %v657, %v653
    %v1158 = vpack.c.b16 %v658, %v654
    %v1159 = vpack.c.b16 %v659, %v655
    %v1160 = vpack.c.b16 %v660, %v656
    %v1161 = vpack.c.b16 %v665, %v661
    %v1162 = vpack.c.b16 %v666, %v662
    %v1163 = vpack.c.b16 %v667, %v663
    %v1164 = vpack.c.b16 %v668, %v664
    %v1165 = vpack.c.b16 %v673, %v669
    %v1166 = vpack.c.b16 %v674, %v670
    %v1167 = vpack.c.b16 %v675, %v671
    %v1168 = vpack.c.b16 %v676, %v672
    %v1169 = vpack.c.b16 %v681, %v677
    %v1170 = vpack.c.b16 %v682, %v678
    %v1171 = vpack.c.b16 %v683, %v679
    %v1172 = vpack.c.b16 %v684, %v680
    %v1173 = vpack.c.b16 %v689, %v685
    %v1174 = vpack.c.b16 %v690, %v686
    %v1175 = vpack.c.b16 %v691, %v687
    %v1176 = vpack.c.b16 %v692, %v688
    %v1177 = vpack.c.b16 %v697, %v693
    %v1178 = vpack.c.b16 %v698, %v694
    %v1179 = vpack.c.b16 %v699, %v695
    %v1180 = vpack.c.b16 %v700, %v696
    %v1181 = vpack.c.b16 %v705, %v701
    %v1182 = vpack.c.b16 %v706, %v702
    %v1183 = vpack.c.b16 %v707, %v703
    %v1184 = vpack.c.b16 %v708, %v704
    %v1185 = vpack.c.b16 %v713, %v709
    %v1186 = vpack.c.b16 %v714, %v710
    %v1187 = vpack.c.b16 %v715, %v711
    %v1188 = vpack.c.b16 %v716, %v712
    %v1189 = vpack.c.b16 %v721, %v717
    %v1190 = vpack.c.b16 %v722, %v718
    %v1191 = vpack.c.b16 %v723, %v719
    %v1192 = vpack.c.b16 %v724, %v720
    %v1193 = vpack.c.b16 %v729, %v725
    %v1194 = vpack.c.b16 %v730, %v726
    %v1195 = vpack.c.b16 %v731, %v727
    %v1196 = vpack.c.b16 %v732, %v728
    %v1197 = vpack.c.b16 %v737, %v733
    %v1198 = vpack.c.b16 %v738, %v734
    %v1199 = vpack.c.b16 %v739, %v735
    %v1200 = vpack.c.b16 %v740, %v736
    %v1201 = vpack.c.b16 %v745, %v741
    %v1202 = vpack.c.b16 %v746, %v742
    %v1203 = vpack.c.b16 %v747, %v743
    %v1204 = vpack.c.b16 %v748, %v744
    %v1205 = vpack.c.b16 %v753, %v749
    %v1206 = vpack.c.b16 %v754, %v750
    %v1207 = vpack.c.b16 %v755, %v751
    %v1208 = vpack.c.b16 %v756, %v752
    %v1209 = vpack.c.b16 %v761, %v757
    %v1210 = vpack.c.b16 %v762, %v758
    %v1211 = vpack.c.b16 %v763, %v759
    %v1212 = vpack.c.b16 %v764, %v760
    %v1213 = vpack.c.b16 %v769, %v765
    %v1214 = vpack.c.b16 %v770, %v766
    %v1215 = vpack.c.b16 %v771, %v767
    %v1216 = vpack.c.b16 %v772, %v768
    %v1217 = vpack.c.b16 %v777, %v773
    %v1218 = vpack.c.b16 %v778, %v774
    %v1219 = vpack.c.b16 %v779, %v775
    %v1220 = vpack.c.b16 %v780, %v776
    %v1221 = vpack.c.b16 %v785, %v781
    %v1222 = vpack.c.b16 %v786, %v782
    %v1223 = vpack.c.b16 %v787, %v783
    %v1224 = vpack.c.b16 %v788, %v784
    %v1225 = vpack.c.b16 %v793, %v789
    %v1226 = vpack.c.b16 %v794, %v790
    %v1227 = vpack.c.b16 %v795, %v791
    %v1228 = vpack.c.b16 %v796, %v792
    %v1229 = vpack.c.b16 %v801, %v797
    %v1230 = vpack.c.b16 %v802, %v798
    %v1231 = vpack.c.b16 %v803, %v799
    %v1232 = vpack.c.b16 %v804, %v800
    %v1233 = vpack.c.b16 %v809, %v805
    %v1234 = vpack.c.b16 %v810, %v806
    %v1235 = vpack.c.b16 %v811, %v807
    %v1236 = vpack.c.b16 %v812, %v808
    %v1237 = vpack.c.b16 %v817, %v813
    %v1238 = vpack.c.b16 %v818, %v814
    %v1239 = vpack.c.b16 %v819, %v815
    %v1240 = vpack.c.b16 %v820, %v816
    %v1241 = vpack.c.b16 %v825, %v821
    %v1242 = vpack.c.b16 %v826, %v822
    %v1243 = vpack.c.b16 %v827, %v823
    %v1244 = vpack.c.b16 %v828, %v824
    %v1245 = vpack.c.b16 %v833, %v829
    %v1246 = vpack.c.b16 %v834, %v830
    %v1247 = vpack.c.b16 %v835, %v831
    %v1248 = vpack.c.b16 %v836, %v832
    %v1249 = vpack.c.b16 %v841, %v837
    %v1250 = vpack.c.b16 %v842, %v838
    %v1251 = vpack.c.b16 %v843, %v839
    %v1252 = vpack.c.b16 %v844, %v840
    %v1253 = vpack.c.b16 %v849, %v845
    %v1254 = vpack.c.b16 %v850, %v846
    %v1255 = vpack.c.b16 %v851, %v847
    %v1256 = vpack.c.b16 %v852, %v848
    %v1257 = vpack.c.b16 %v857, %v853
    %v1258 = vpack.c.b16 %v858, %v854
    %v1259 = vpack.c.b16 %v859, %v855
    %v1260 = vpack.c.b16 %v860, %v856
    %v1261 = vpack.c.b16 %v865, %v861
    %v1262 = vpack.c.b16 %v866, %v862
    %v1263 = vpack.c.b16 %v867, %v863
    %v1264 = vpack.c.b16 %v868, %v864
    %v1265 = vpack.c.b16 %v873, %v869
    %v1266 = vpack.c.b16 %v874, %v870
    %v1267 = vpack.c.b16 %v875, %v871
    %v1268 = vpack.c.b16 %v876, %v872
    %v1269 = vpack.c.b16 %v881, %v877
    %v1270 = vpack.c.b16 %v882, %v878
    %v1271 = vpack.c.b16 %v883, %v879
    %v1272 = vpack.c.b16 %v884, %v880
    %v1273 = vpack.c.b16 %v889, %v885
    %v1274 = vpack.c.b16 %v890, %v886
    %v1275 = vpack.c.b16 %v891, %v887
    %v1276 = vpack.c.b16 %v892, %v888
    %v1277 = vpack.c.b16 %v897, %v893
    %v1278 = vpack.c.b16 %v898, %v894
    %v1279 = vpack.c.b16 %v899, %v895
    %v1280 = vpack.c.b16 %v900, %v896
    %v1281 = vpack.c.b16 %v905, %v901
    %v1282 = vpack.c.b16 %v906, %v902
    %v1283 = vpack.c.b16 %v907, %v903
    %v1284 = vpack.c.b16 %v908, %v904
    %v1285 = vpack.c.b16 %v913, %v909
    %v1286 = vpack.c.b16 %v914, %v910
    %v1287 = vpack.c.b16 %v915, %v911
    %v1288 = vpack.c.b16 %v916, %v912
    %v1289 = vpack.c.b16 %v921, %v917
    %v1290 = vpack.c.b16 %v922, %v918
    %v1291 = vpack.c.b16 %v923, %v919
    %v1292 = vpack.c.b16 %v924, %v920
    %v1293 = vpack.c.b16 %v929, %v925
    %v1294 = vpack.c.b16 %v930, %v926
    %v1295 = vpack.c.b16 %v931, %v927
    %v1296 = vpack.c.b16 %v932, %v928
    %v1297 = vpack.c.b16 %v937, %v933
    %v1298 = vpack.c.b16 %v938, %v934
    %v1299 = vpack.c.b16 %v939, %v935
    %v1300 = vpack.c.b16 %v940, %v936
    %v1301 = vpack.c.b16 %v945, %v941
    %v1302 = vpack.c.b16 %v946, %v942
    %v1303 = vpack.c.b16 %v947, %v943
    %v1304 = vpack.c.b16 %v948, %v944
    %v1305 = vpack.c.b16 %v953, %v949
    %v1306 = vpack.c.b16 %v954, %v950
    %v1307 = vpack.c.b16 %v955, %v951
    %v1308 = vpack.c.b16 %v956, %v952
    %v1309 = vpack.c.b16 %v961, %v957
    %v1310 = vpack.c.b16 %v962, %v958
    %v1311 = vpack.c.b16 %v963, %v959
    %v1312 = vpack.c.b16 %v964, %v960
    %v1313 = vpack.c.b16 %v969, %v965
    %v1314 = vpack.c.b16 %v970, %v966
    %v1315 = vpack.c.b16 %v971, %v967
    %v1316 = vpack.c.b16 %v972, %v968
    %v1317 = vpack.c.b16 %v977, %v973
    %v1318 = vpack.c.b16 %v978, %v974
    %v1319 = vpack.c.b16 %v979, %v975
    %v1320 = vpack.c.b16 %v980, %v976
    %v1321 = vpack.c.b16 %v985, %v981
    %v1322 = vpack.c.b16 %v986, %v982
    %v1323 = vpack.c.b16 %v987, %v983
    %v1324 = vpack.c.b16 %v988, %v984
    %v1325 = vpack.c.b16 %v993, %v989
    %v1326 = vpack.c.b16 %v994, %v990
    %v1327 = vpack.c.b16 %v995, %v991
    %v1328 = vpack.c.b16 %v996, %v992
    %v1329 = vpack.c.b16 %v1001, %v997
    %v1330 = vpack.c.b16 %v1002, %v998
    %v1331 = vpack.c.b16 %v1003, %v999
    %v1332 = vpack.c.b16 %v1004, %v1000
    %v1333 = vpack.c.b16 %v1009, %v1005
    %v1334 = vpack.c.b16 %v1010, %v1006
    %v1335 = vpack.c.b16 %v1011, %v1007
    %v1336 = vpack.c.b16 %v1012, %v1008
    %v1337 = vpack.c.b16 %v1017, %v1013
    %v1338 = vpack.c.b16 %v1018, %v1014
    %v1339 = vpack.c.b16 %v1019, %v1015
    %v1340 = vpack.c.b16 %v1020, %v1016
    %v1341 = vpack.c.b16 %v1025, %v1021
    %v1342 = vpack.c.b16 %v1026, %v1022
    %v1343 = vpack.c.b16 %v1027, %v1023
    %v1344 = vpack.c.b16 %v1028, %v1024
    %v1345 = vpack.c.b16 %v1033, %v1029
    %v1346 = vpack.c.b16 %v1034, %v1030
    %v1347 = vpack.c.b16 %v1035, %v1031
    %v1348 = vpack.c.b16 %v1036, %v1032
    %v1349 = vpack.c.b16 %v1041, %v1037
    %v1350 = vpack.c.b16 %v1042, %v1038
    %v1351 = vpack.c.b16 %v1043, %v1039
    %v1352 = vpack.c.b16 %v1044, %v1040
    %v1353 = vpack.c.b16 %v1049, %v1045
    %v1354 = vpack.c.b16 %v1050, %v1046
    %v1355 = vpack.c.b16 %v1051, %v1047
    %v1356 = vpack.c.b16 %v1052, %v1048
    %v1357 = vpack.c.b16 %v1057, %v1053
    %v1358 = vpack.c.b16 %v1058, %v1054
    %v1359 = vpack.c.b16 %v1059, %v1055
    %v1360 = vpack.c.b16 %v1060, %v1056
    %v1361 = vpack.c.b16 %v1065, %v1061
    %v1362 = vpack.c.b16 %v1066, %v1062
    %v1363 = vpack.c.b16 %v1067, %v1063
    %v1364 = vpack.c.b16 %v1068, %v1064
    %v1365 = vpack.c.b16 %v1073, %v1069
    %v1366 = vpack.c.b16 %v1074, %v1070
    %v1367 = vpack.c.b16 %v1075, %v1071
    %v1368 = vpack.c.b16 %v1076, %v1072
    %v1369 = vpack.c.b16 %v1081, %v1077
    %v1370 = vpack.c.b16 %v1082, %v1078
    %v1371 = vpack.c.b16 %v1083, %v1079
    %v1372 = vpack.c.b16 %v1084, %v1080
    %v1373 = vpack.c.b16 %v1089, %v1085
    %v1374 = vpack.c.b16 %v1090, %v1086
    %v1375 = vpack.c.b16 %v1091, %v1087
    %v1376 = vpack.c.b16 %v1092, %v1088
    %v1377 = vpack.c.b16 %v1097, %v1093
    %v1378 = vpack.c.b16 %v1098, %v1094
    %v1379 = vpack.c.b16 %v1099, %v1095
    %v1380 = vpack.c.b16 %v1100, %v1096
    %v1381 = vpack.c.b16 %v1105, %v1101
    %v1382 = vpack.c.b16 %v1106, %v1102
    %v1383 = vpack.c.b16 %v1107, %v1103
    %v1384 = vpack.c.b16 %v1108, %v1104
    %v1385 = vpack.c.b16 %v1113, %v1109
    %v1386 = vpack.c.b16 %v1114, %v1110
    %v1387 = vpack.c.b16 %v1115, %v1111
    %v1388 = vpack.c.b16 %v1116, %v1112
    %v1389 = vpack.c.b16 %v1121, %v1117
    %v1390 = vpack.c.b16 %v1122, %v1118
    %v1391 = vpack.c.b16 %v1123, %v1119
    %v1392 = vpack.c.b16 %v1124, %v1120
    %v1393 = vpack.c.b16 %v1129, %v1125
    %v1394 = vpack.c.b16 %v1130, %v1126
    %v1395 = vpack.c.b16 %v1131, %v1127
    %v1396 = vpack.c.b16 %v1132, %v1128
    %v1397 = vpack.c.b16 %v1137, %v1133
    %v1398 = vpack.c.b16 %v1138, %v1134
    %v1399 = vpack.c.b16 %v1139, %v1135
    %v1400 = vpack.c.b16 %v1140, %v1136
    %v1401 = vpack.c.b16 %v1145, %v1141
    %v1402 = vpack.c.b16 %v1146, %v1142
    %v1403 = vpack.c.b16 %v1147, %v1143
    %v1404 = vpack.c.b16 %v1148, %v1144
    %1661 = vmatpush.bf16.msra.mxu0 %v1177
    %1662 = vmatpush.bf16.msra.mxu0 %v1173
    %1663 = vmatpush.bf16.msra.mxu0 %v1169
    %1664 = vmatpush.bf16.msra.mxu0 %v1165
    %1665 = vmatpush.bf16.msra.mxu0 %v1161
    %1666 = vmatpush.bf16.msra.mxu0 %v1157
    %1667 = vmatpush.bf16.msra.mxu0 %v1153
    %1668 = vmatpush.bf16.msra.mxu0 %v1149
    %1669 = vmatmul.bf16.gmra.mxu0 %v107
    %v1670 = vpop.f32.mrf.mxu0
    %v1671 = vadd.f32 %v373, %v1670
    %v1672 = vpop.f32.mrf.mxu0
    %1673 = vdwg.mxu0
    %1674 = vmatpush.bf16.msra.mxu0 %v1209
    %1675 = vmatpush.bf16.msra.mxu0 %v1205
    %1676 = vmatpush.bf16.msra.mxu0 %v1201
    %1677 = vmatpush.bf16.msra.mxu0 %v1197
    %1678 = vmatpush.bf16.msra.mxu0 %v1193
    %1679 = vmatpush.bf16.msra.mxu0 %v1189
    %1680 = vmatpush.bf16.msra.mxu0 %v1185
    %1681 = vmatpush.bf16.msra.mxu0 %v1181
    %1682 = vmatmul.bf16.gmra.mxu0 %v108
    %v1683 = vpop.f32.mrf.mxu0
    %v1684 = vadd.f32 %v1671, %v1683
    %v1685 = vpop.f32.mrf.mxu0
    %1686 = vdwg.mxu0
    %1687 = vmatpush.bf16.msra.mxu0 %v1241
    %1688 = vmatpush.bf16.msra.mxu0 %v1237
    %1689 = vmatpush.bf16.msra.mxu0 %v1233
    %1690 = vmatpush.bf16.msra.mxu0 %v1229
    %1691 = vmatpush.bf16.msra.mxu0 %v1225
    %1692 = vmatpush.bf16.msra.mxu0 %v1221
    %1693 = vmatpush.bf16.msra.mxu0 %v1217
    %1694 = vmatpush.bf16.msra.mxu0 %v1213
    %1695 = vmatmul.bf16.gmra.mxu0 %v109
    %v1696 = vpop.f32.mrf.mxu0
    %v1697 = vadd.f32 %v1684, %v1696
    %v1698 = vpop.f32.mrf.mxu0
    %1699 = vdwg.mxu0
    %1700 = vmatpush.bf16.msra.mxu0 %v1273
    %1701 = vmatpush.bf16.msra.mxu0 %v1269
    %1702 = vmatpush.bf16.msra.mxu0 %v1265
    %1703 = vmatpush.bf16.msra.mxu0 %v1261
    %1704 = vmatpush.bf16.msra.mxu0 %v1257
    %1705 = vmatpush.bf16.msra.mxu0 %v1253
    %1706 = vmatpush.bf16.msra.mxu0 %v1249
    %1707 = vmatpush.bf16.msra.mxu0 %v1245
    %1708 = vmatmul.bf16.gmra.mxu0 %v110
    %v1709 = vpop.f32.mrf.mxu0
    %v1710 = vadd.f32 %v1697, %v1709
    %v1711 = vpop.f32.mrf.mxu0
    %1712 = vdwg.mxu0
    %1713 = vmatpush.bf16.msra.mxu0 %v1305
    %1714 = vmatpush.bf16.msra.mxu0 %v1301
    %1715 = vmatpush.bf16.msra.mxu0 %v1297
    %1716 = vmatpush.bf16.msra.mxu0 %v1293
    %1717 = vmatpush.bf16.msra.mxu0 %v1289
    %1718 = vmatpush.bf16.msra.mxu0 %v1285
    %1719 = vmatpush.bf16.msra.mxu0 %v1281
    %1720 = vmatpush.bf16.msra.mxu0 %v1277
    %1721 = vmatmul.bf16.gmra.mxu0 %v111
    %v1722 = vpop.f32.mrf.mxu0
    %v1723 = vadd.f32 %v1710, %v1722
    %v1724 = vpop.f32.mrf.mxu0
    %1725 = vdwg.mxu0
    %1726 = vmatpush.bf16.msra.mxu0 %v1337
    %1727 = vmatpush.bf16.msra.mxu0 %v1333
    %1728 = vmatpush.bf16.msra.mxu0 %v1329
    %1729 = vmatpush.bf16.msra.mxu0 %v1325
    %1730 = vmatpush.bf16.msra.mxu0 %v1321
    %1731 = vmatpush.bf16.msra.mxu0 %v1317
    %1732 = vmatpush.bf16.msra.mxu0 %v1313
    %1733 = vmatpush.bf16.msra.mxu0 %v1309
    %1734 = vmatmul.bf16.gmra.mxu0 %v112
    %v1735 = vpop.f32.mrf.mxu0
    %v1736 = vadd.f32 %v1723, %v1735
    %v1737 = vpop.f32.mrf.mxu0
    %1738 = vdwg.mxu0
    %1739 = vmatpush.bf16.msra.mxu0 %v1369
    %1740 = vmatpush.bf16.msra.mxu0 %v1365
    %1741 = vmatpush.bf16.msra.mxu0 %v1361
    %1742 = vmatpush.bf16.msra.mxu0 %v1357
    %1743 = vmatpush.bf16.msra.mxu0 %v1353
    %1744 = vmatpush.bf16.msra.mxu0 %v1349
    %1745 = vmatpush.bf16.msra.mxu0 %v1345
    %1746 = vmatpush.bf16.msra.mxu0 %v1341
    %1747 = vmatmul.bf16.gmra.mxu0 %v113
    %v1748 = vpop.f32.mrf.mxu0
    %v1749 = vadd.f32 %v1736, %v1748
    %v1750 = vpop.f32.mrf.mxu0
    %1751 = vdwg.mxu0
    %1752 = vmatpush.bf16.msra.mxu0 %v1401
    %1753 = vmatpush.bf16.msra.mxu0 %v1397
    %1754 = vmatpush.bf16.msra.mxu0 %v1393
    %1755 = vmatpush.bf16.msra.mxu0 %v1389
    %1756 = vmatpush.bf16.msra.mxu0 %v1385
    %1757 = vmatpush.bf16.msra.mxu0 %v1381
    %1758 = vmatpush.bf16.msra.mxu0 %v1377
    %1759 = vmatpush.bf16.msra.mxu0 %v1373
    %1760 = vmatmul.bf16.gmra.mxu0 %v114
    %v1761 = vpop.f32.mrf.mxu0
    %v1762 = vadd.f32 %v1749, %v1761
    %v1763 = vpop.f32.mrf.mxu0
    %1764 = vdwg.mxu0
    %1765 = vmatpush.bf16.msra.mxu0 %v1178
    %1766 = vmatpush.bf16.msra.mxu0 %v1174
    %1767 = vmatpush.bf16.msra.mxu0 %v1170
    %1768 = vmatpush.bf16.msra.mxu0 %v1166
    %1769 = vmatpush.bf16.msra.mxu0 %v1162
    %1770 = vmatpush.bf16.msra.mxu0 %v1158
    %1771 = vmatpush.bf16.msra.mxu0 %v1154
    %1772 = vmatpush.bf16.msra.mxu0 %v1150
    %1773 = vmatmul.bf16.gmra.mxu0 %v107
    %v1774 = vpop.f32.mrf.mxu0
    %v1775 = vadd.f32 %v374, %v1774
    %v1776 = vpop.f32.mrf.mxu0
    %1777 = vdwg.mxu0
    %1778 = vmatpush.bf16.msra.mxu0 %v1210
    %1779 = vmatpush.bf16.msra.mxu0 %v1206
    %1780 = vmatpush.bf16.msra.mxu0 %v1202
    %1781 = vmatpush.bf16.msra.mxu0 %v1198
    %1782 = vmatpush.bf16.msra.mxu0 %v1194
    %1783 = vmatpush.bf16.msra.mxu0 %v1190
    %1784 = vmatpush.bf16.msra.mxu0 %v1186
    %1785 = vmatpush.bf16.msra.mxu0 %v1182
    %1786 = vmatmul.bf16.gmra.mxu0 %v108
    %v1787 = vpop.f32.mrf.mxu0
    %v1788 = vadd.f32 %v1775, %v1787
    %v1789 = vpop.f32.mrf.mxu0
    %1790 = vdwg.mxu0
    %1791 = vmatpush.bf16.msra.mxu0 %v1242
    %1792 = vmatpush.bf16.msra.mxu0 %v1238
    %1793 = vmatpush.bf16.msra.mxu0 %v1234
    %1794 = vmatpush.bf16.msra.mxu0 %v1230
    %1795 = vmatpush.bf16.msra.mxu0 %v1226
    %1796 = vmatpush.bf16.msra.mxu0 %v1222
    %1797 = vmatpush.bf16.msra.mxu0 %v1218
    %1798 = vmatpush.bf16.msra.mxu0 %v1214
    %1799 = vmatmul.bf16.gmra.mxu0 %v109
    %v1800 = vpop.f32.mrf.mxu0
    %v1801 = vadd.f32 %v1788, %v1800
    %v1802 = vpop.f32.mrf.mxu0
    %1803 = vdwg.mxu0
    %1804 = vmatpush.bf16.msra.mxu0 %v1274
    %1805 = vmatpush.bf16.msra.mxu0 %v1270
    %1806 = vmatpush.bf16.msra.mxu0 %v1266
    %1807 = vmatpush.bf16.msra.mxu0 %v1262
    %1808 = vmatpush.bf16.msra.mxu0 %v1258
    %1809 = vmatpush.bf16.msra.mxu0 %v1254
    %1810 = vmatpush.bf16.msra.mxu0 %v1250
    %1811 = vmatpush.bf16.msra.mxu0 %v1246
    %1812 = vmatmul.bf16.gmra.mxu0 %v110
    %v1813 = vpop.f32.mrf.mxu0
    %v1814 = vadd.f32 %v1801, %v1813
    %v1815 = vpop.f32.mrf.mxu0
    %1816 = vdwg.mxu0
    %1817 = vmatpush.bf16.msra.mxu0 %v1306
    %1818 = vmatpush.bf16.msra.mxu0 %v1302
    %1819 = vmatpush.bf16.msra.mxu0 %v1298
    %1820 = vmatpush.bf16.msra.mxu0 %v1294
    %1821 = vmatpush.bf16.msra.mxu0 %v1290
    %1822 = vmatpush.bf16.msra.mxu0 %v1286
    %1823 = vmatpush.bf16.msra.mxu0 %v1282
    %1824 = vmatpush.bf16.msra.mxu0 %v1278
    %1825 = vmatmul.bf16.gmra.mxu0 %v111
    %v1826 = vpop.f32.mrf.mxu0
    %v1827 = vadd.f32 %v1814, %v1826
    %v1828 = vpop.f32.mrf.mxu0
    %1829 = vdwg.mxu0
    %1830 = vmatpush.bf16.msra.mxu0 %v1338
    %1831 = vmatpush.bf16.msra.mxu0 %v1334
    %1832 = vmatpush.bf16.msra.mxu0 %v1330
    %1833 = vmatpush.bf16.msra.mxu0 %v1326
    %1834 = vmatpush.bf16.msra.mxu0 %v1322
    %1835 = vmatpush.bf16.msra.mxu0 %v1318
    %1836 = vmatpush.bf16.msra.mxu0 %v1314
    %1837 = vmatpush.bf16.msra.mxu0 %v1310
    %1838 = vmatmul.bf16.gmra.mxu0 %v112
    %v1839 = vpop.f32.mrf.mxu0
    %v1840 = vadd.f32 %v1827, %v1839
    %v1841 = vpop.f32.mrf.mxu0
    %1842 = vdwg.mxu0
    %1843 = vmatpush.bf16.msra.mxu0 %v1370
    %1844 = vmatpush.bf16.msra.mxu0 %v1366
    %1845 = vmatpush.bf16.msra.mxu0 %v1362
    %1846 = vmatpush.bf16.msra.mxu0 %v1358
    %1847 = vmatpush.bf16.msra.mxu0 %v1354
    %1848 = vmatpush.bf16.msra.mxu0 %v1350
    %1849 = vmatpush.bf16.msra.mxu0 %v1346
    %1850 = vmatpush.bf16.msra.mxu0 %v1342
    %1851 = vmatmul.bf16.gmra.mxu0 %v113
    %v1852 = vpop.f32.mrf.mxu0
    %v1853 = vadd.f32 %v1840, %v1852
    %v1854 = vpop.f32.mrf.mxu0
    %1855 = vdwg.mxu0
    %1856 = vmatpush.bf16.msra.mxu0 %v1402
    %1857 = vmatpush.bf16.msra.mxu0 %v1398
    %1858 = vmatpush.bf16.msra.mxu0 %v1394
    %1859 = vmatpush.bf16.msra.mxu0 %v1390
    %1860 = vmatpush.bf16.msra.mxu0 %v1386
    %1861 = vmatpush.bf16.msra.mxu0 %v1382
    %1862 = vmatpush.bf16.msra.mxu0 %v1378
    %1863 = vmatpush.bf16.msra.mxu0 %v1374
    %1864 = vmatmul.bf16.gmra.mxu0 %v114
    %v1865 = vpop.f32.mrf.mxu0
    %v1866 = vadd.f32 %v1853, %v1865
    %v1867 = vpop.f32.mrf.mxu0
    %1868 = vdwg.mxu0
    %1869 = vmatpush.bf16.msra.mxu0 %v1179
    %1870 = vmatpush.bf16.msra.mxu0 %v1175
    %1871 = vmatpush.bf16.msra.mxu0 %v1171
    %1872 = vmatpush.bf16.msra.mxu0 %v1167
    %1873 = vmatpush.bf16.msra.mxu0 %v1163
    %1874 = vmatpush.bf16.msra.mxu0 %v1159
    %1875 = vmatpush.bf16.msra.mxu0 %v1155
    %1876 = vmatpush.bf16.msra.mxu0 %v1151
    %1877 = vmatmul.bf16.gmra.mxu0 %v107
    %v1878 = vpop.f32.mrf.mxu0
    %v1879 = vadd.f32 %v375, %v1878
    %v1880 = vpop.f32.mrf.mxu0
    %1881 = vdwg.mxu0
    %1882 = vmatpush.bf16.msra.mxu0 %v1211
    %1883 = vmatpush.bf16.msra.mxu0 %v1207
    %1884 = vmatpush.bf16.msra.mxu0 %v1203
    %1885 = vmatpush.bf16.msra.mxu0 %v1199
    %1886 = vmatpush.bf16.msra.mxu0 %v1195
    %1887 = vmatpush.bf16.msra.mxu0 %v1191
    %1888 = vmatpush.bf16.msra.mxu0 %v1187
    %1889 = vmatpush.bf16.msra.mxu0 %v1183
    %1890 = vmatmul.bf16.gmra.mxu0 %v108
    %v1891 = vpop.f32.mrf.mxu0
    %v1892 = vadd.f32 %v1879, %v1891
    %v1893 = vpop.f32.mrf.mxu0
    %1894 = vdwg.mxu0
    %1895 = vmatpush.bf16.msra.mxu0 %v1243
    %1896 = vmatpush.bf16.msra.mxu0 %v1239
    %1897 = vmatpush.bf16.msra.mxu0 %v1235
    %1898 = vmatpush.bf16.msra.mxu0 %v1231
    %1899 = vmatpush.bf16.msra.mxu0 %v1227
    %1900 = vmatpush.bf16.msra.mxu0 %v1223
    %1901 = vmatpush.bf16.msra.mxu0 %v1219
    %1902 = vmatpush.bf16.msra.mxu0 %v1215
    %1903 = vmatmul.bf16.gmra.mxu0 %v109
    %v1904 = vpop.f32.mrf.mxu0
    %v1905 = vadd.f32 %v1892, %v1904
    %v1906 = vpop.f32.mrf.mxu0
    %1907 = vdwg.mxu0
    %1908 = vmatpush.bf16.msra.mxu0 %v1275
    %1909 = vmatpush.bf16.msra.mxu0 %v1271
    %1910 = vmatpush.bf16.msra.mxu0 %v1267
    %1911 = vmatpush.bf16.msra.mxu0 %v1263
    %1912 = vmatpush.bf16.msra.mxu0 %v1259
    %1913 = vmatpush.bf16.msra.mxu0 %v1255
    %1914 = vmatpush.bf16.msra.mxu0 %v1251
    %1915 = vmatpush.bf16.msra.mxu0 %v1247
    %1916 = vmatmul.bf16.gmra.mxu0 %v110
    %v1917 = vpop.f32.mrf.mxu0
    %v1918 = vadd.f32 %v1905, %v1917
    %v1919 = vpop.f32.mrf.mxu0
    %1920 = vdwg.mxu0
    %1921 = vmatpush.bf16.msra.mxu0 %v1307
    %1922 = vmatpush.bf16.msra.mxu0 %v1303
    %1923 = vmatpush.bf16.msra.mxu0 %v1299
    %1924 = vmatpush.bf16.msra.mxu0 %v1295
    %1925 = vmatpush.bf16.msra.mxu0 %v1291
    %1926 = vmatpush.bf16.msra.mxu0 %v1287
    %1927 = vmatpush.bf16.msra.mxu0 %v1283
    %1928 = vmatpush.bf16.msra.mxu0 %v1279
    %1929 = vmatmul.bf16.gmra.mxu0 %v111
    %v1930 = vpop.f32.mrf.mxu0
    %v1931 = vadd.f32 %v1918, %v1930
    %v1932 = vpop.f32.mrf.mxu0
    %1933 = vdwg.mxu0
    %1934 = vmatpush.bf16.msra.mxu0 %v1339
    %1935 = vmatpush.bf16.msra.mxu0 %v1335
    %1936 = vmatpush.bf16.msra.mxu0 %v1331
    %1937 = vmatpush.bf16.msra.mxu0 %v1327
    %1938 = vmatpush.bf16.msra.mxu0 %v1323
    %1939 = vmatpush.bf16.msra.mxu0 %v1319
    %1940 = vmatpush.bf16.msra.mxu0 %v1315
    %1941 = vmatpush.bf16.msra.mxu0 %v1311
    %1942 = vmatmul.bf16.gmra.mxu0 %v112
    %v1943 = vpop.f32.mrf.mxu0
    %v1944 = vadd.f32 %v1931, %v1943
    %v1945 = vpop.f32.mrf.mxu0
    %1946 = vdwg.mxu0
    %1947 = vmatpush.bf16.msra.mxu0 %v1371
    %1948 = vmatpush.bf16.msra.mxu0 %v1367
    %1949 = vmatpush.bf16.msra.mxu0 %v1363
    %1950 = vmatpush.bf16.msra.mxu0 %v1359
    %1951 = vmatpush.bf16.msra.mxu0 %v1355
    %1952 = vmatpush.bf16.msra.mxu0 %v1351
    %1953 = vmatpush.bf16.msra.mxu0 %v1347
    %1954 = vmatpush.bf16.msra.mxu0 %v1343
    %1955 = vmatmul.bf16.gmra.mxu0 %v113
    %v1956 = vpop.f32.mrf.mxu0
    %v1957 = vadd.f32 %v1944, %v1956
    %v1958 = vpop.f32.mrf.mxu0
    %1959 = vdwg.mxu0
    %1960 = vmatpush.bf16.msra.mxu0 %v1403
    %1961 = vmatpush.bf16.msra.mxu0 %v1399
    %1962 = vmatpush.bf16.msra.mxu0 %v1395
    %1963 = vmatpush.bf16.msra.mxu0 %v1391
    %1964 = vmatpush.bf16.msra.mxu0 %v1387
    %1965 = vmatpush.bf16.msra.mxu0 %v1383
    %1966 = vmatpush.bf16.msra.mxu0 %v1379
    %1967 = vmatpush.bf16.msra.mxu0 %v1375
    %1968 = vmatmul.bf16.gmra.mxu0 %v114
    %v1969 = vpop.f32.mrf.mxu0
    %v1970 = vadd.f32 %v1957, %v1969
    %v1971 = vpop.f32.mrf.mxu0
    %1972 = vdwg.mxu0
    %1973 = vmatpush.bf16.msra.mxu0 %v1180
    %1974 = vmatpush.bf16.msra.mxu0 %v1176
    %1975 = vmatpush.bf16.msra.mxu0 %v1172
    %1976 = vmatpush.bf16.msra.mxu0 %v1168
    %1977 = vmatpush.bf16.msra.mxu0 %v1164
    %1978 = vmatpush.bf16.msra.mxu0 %v1160
    %1979 = vmatpush.bf16.msra.mxu0 %v1156
    %1980 = vmatpush.bf16.msra.mxu0 %v1152
    %1981 = vmatmul.bf16.gmra.mxu0 %v107
    %v1982 = vpop.f32.mrf.mxu0
    %v1983 = vadd.f32 %v376, %v1982
    %v1984 = vpop.f32.mrf.mxu0
    %1985 = vdwg.mxu0
    %1986 = vmatpush.bf16.msra.mxu0 %v1212
    %1987 = vmatpush.bf16.msra.mxu0 %v1208
    %1988 = vmatpush.bf16.msra.mxu0 %v1204
    %1989 = vmatpush.bf16.msra.mxu0 %v1200
    %1990 = vmatpush.bf16.msra.mxu0 %v1196
    %1991 = vmatpush.bf16.msra.mxu0 %v1192
    %1992 = vmatpush.bf16.msra.mxu0 %v1188
    %1993 = vmatpush.bf16.msra.mxu0 %v1184
    %1994 = vmatmul.bf16.gmra.mxu0 %v108
    %v1995 = vpop.f32.mrf.mxu0
    %v1996 = vadd.f32 %v1983, %v1995
    %v1997 = vpop.f32.mrf.mxu0
    %1998 = vdwg.mxu0
    %1999 = vmatpush.bf16.msra.mxu0 %v1244
    %2000 = vmatpush.bf16.msra.mxu0 %v1240
    %2001 = vmatpush.bf16.msra.mxu0 %v1236
    %2002 = vmatpush.bf16.msra.mxu0 %v1232
    %2003 = vmatpush.bf16.msra.mxu0 %v1228
    %2004 = vmatpush.bf16.msra.mxu0 %v1224
    %2005 = vmatpush.bf16.msra.mxu0 %v1220
    %2006 = vmatpush.bf16.msra.mxu0 %v1216
    %2007 = vmatmul.bf16.gmra.mxu0 %v109
    %v2008 = vpop.f32.mrf.mxu0
    %v2009 = vadd.f32 %v1996, %v2008
    %v2010 = vpop.f32.mrf.mxu0
    %2011 = vdwg.mxu0
    %2012 = vmatpush.bf16.msra.mxu0 %v1276
    %2013 = vmatpush.bf16.msra.mxu0 %v1272
    %2014 = vmatpush.bf16.msra.mxu0 %v1268
    %2015 = vmatpush.bf16.msra.mxu0 %v1264
    %2016 = vmatpush.bf16.msra.mxu0 %v1260
    %2017 = vmatpush.bf16.msra.mxu0 %v1256
    %2018 = vmatpush.bf16.msra.mxu0 %v1252
    %2019 = vmatpush.bf16.msra.mxu0 %v1248
    %2020 = vmatmul.bf16.gmra.mxu0 %v110
    %v2021 = vpop.f32.mrf.mxu0
    %v2022 = vadd.f32 %v2009, %v2021
    %v2023 = vpop.f32.mrf.mxu0
    %2024 = vdwg.mxu0
    %2025 = vmatpush.bf16.msra.mxu0 %v1308
    %2026 = vmatpush.bf16.msra.mxu0 %v1304
    %2027 = vmatpush.bf16.msra.mxu0 %v1300
    %2028 = vmatpush.bf16.msra.mxu0 %v1296
    %2029 = vmatpush.bf16.msra.mxu0 %v1292
    %2030 = vmatpush.bf16.msra.mxu0 %v1288
    %2031 = vmatpush.bf16.msra.mxu0 %v1284
    %2032 = vmatpush.bf16.msra.mxu0 %v1280
    %2033 = vmatmul.bf16.gmra.mxu0 %v111
    %v2034 = vpop.f32.mrf.mxu0
    %v2035 = vadd.f32 %v2022, %v2034
    %v2036 = vpop.f32.mrf.mxu0
    %2037 = vdwg.mxu0
    %2038 = vmatpush.bf16.msra.mxu0 %v1340
    %2039 = vmatpush.bf16.msra.mxu0 %v1336
    %2040 = vmatpush.bf16.msra.mxu0 %v1332
    %2041 = vmatpush.bf16.msra.mxu0 %v1328
    %2042 = vmatpush.bf16.msra.mxu0 %v1324
    %2043 = vmatpush.bf16.msra.mxu0 %v1320
    %2044 = vmatpush.bf16.msra.mxu0 %v1316
    %2045 = vmatpush.bf16.msra.mxu0 %v1312
    %2046 = vmatmul.bf16.gmra.mxu0 %v112
    %v2047 = vpop.f32.mrf.mxu0
    %v2048 = vadd.f32 %v2035, %v2047
    %v2049 = vpop.f32.mrf.mxu0
    %2050 = vdwg.mxu0
    %2051 = vmatpush.bf16.msra.mxu0 %v1372
    %2052 = vmatpush.bf16.msra.mxu0 %v1368
    %2053 = vmatpush.bf16.msra.mxu0 %v1364
    %2054 = vmatpush.bf16.msra.mxu0 %v1360
    %2055 = vmatpush.bf16.msra.mxu0 %v1356
    %2056 = vmatpush.bf16.msra.mxu0 %v1352
    %2057 = vmatpush.bf16.msra.mxu0 %v1348
    %2058 = vmatpush.bf16.msra.mxu0 %v1344
    %2059 = vmatmul.bf16.gmra.mxu0 %v113
    %v2060 = vpop.f32.mrf.mxu0
    %v2061 = vadd.f32 %v2048, %v2060
    %v2062 = vpop.f32.mrf.mxu0
    %2063 = vdwg.mxu0
    %2064 = vmatpush.bf16.msra.mxu0 %v1404
    %2065 = vmatpush.bf16.msra.mxu0 %v1400
    %2066 = vmatpush.bf16.msra.mxu0 %v1396
    %2067 = vmatpush.bf16.msra.mxu0 %v1392
    %2068 = vmatpush.bf16.msra.mxu0 %v1388
    %2069 = vmatpush.bf16.msra.mxu0 %v1384
    %2070 = vmatpush.bf16.msra.mxu0 %v1380
    %2071 = vmatpush.bf16.msra.mxu0 %v1376
    %2072 = vmatmul.bf16.gmra.mxu0 %v114
    %v2073 = vpop.f32.mrf.mxu0
    %v2074 = vadd.f32 %v2061, %v2073
    %v2075 = vpop.f32.mrf.mxu0
    %2076 = vdwg.mxu0
    %v2077 = vmax.f32 %v1762, 0.0
    %v2078 = vmax.f32 %v1866, 0.0
    %v2079 = vmax.f32 %v1970, 0.0
    %v2080 = vmax.f32 %v2074, 0.0
    %v2081 = vpack.c.bf16 %v2077, %v2077
    %v2082 = vpack.c.bf16 %v2078, %v2078
    %v2083 = vpack.c.bf16 %v2079, %v2079
    %v2084 = vpack.c.bf16 %v2080, %v2080
    %v2085 = vld [vmem:[#allocation8] sm:$0xff]
    %v2086 = vld [vmem:[#allocation8 + $0x8] sm:$0xff]
    %v2087 = vld [vmem:[#allocation8 + $0x10] sm:$0xff]
    %v2088 = vld [vmem:[#allocation8 + $0x18] sm:$0xff]
    %v2089 = vld [vmem:[#allocation8 + $0x20] sm:$0xff]
    %v2090 = vld [vmem:[#allocation8 + $0x28] sm:$0xff]
    %v2091 = vld [vmem:[#allocation8 + $0x30] sm:$0xff]
    %v2092 = vld [vmem:[#allocation8 + $0x38] sm:$0xff]
    %v2093 = vld [vmem:[#allocation8 + $0x40] sm:$0xff]
    %v2094 = vld [vmem:[#allocation8 + $0x48] sm:$0xff]
    %v2095 = vld [vmem:[#allocation8 + $0x50] sm:$0xff]
    %v2096 = vld [vmem:[#allocation8 + $0x58] sm:$0xff]
    %v2097 = vld [vmem:[#allocation8 + $0x60] sm:$0xff]
    %v2098 = vld [vmem:[#allocation8 + $0x68] sm:$0xff]
    %v2099 = vld [vmem:[#allocation8 + $0x70] sm:$0xff]
    %v2100 = vld [vmem:[#allocation8 + $0x78] sm:$0xff]
    %v2101 = vld [vmem:[#allocation8 + $0x80] sm:$0xff]
    %v2102 = vld [vmem:[#allocation8 + $0x88] sm:$0xff]
    %v2103 = vld [vmem:[#allocation8 + $0x90] sm:$0xff]
    %v2104 = vld [vmem:[#allocation8 + $0x98] sm:$0xff]
    %v2105 = vld [vmem:[#allocation8 + $0xa0] sm:$0xff]
    %v2106 = vld [vmem:[#allocation8 + $0xa8] sm:$0xff]
    %v2107 = vld [vmem:[#allocation8 + $0xb0] sm:$0xff]
    %v2108 = vld [vmem:[#allocation8 + $0xb8] sm:$0xff]
    %v2109 = vld [vmem:[#allocation8 + $0xc0] sm:$0xff]
    %v2110 = vld [vmem:[#allocation8 + $0xc8] sm:$0xff]
    %v2111 = vld [vmem:[#allocation8 + $0xd0] sm:$0xff]
    %v2112 = vld [vmem:[#allocation8 + $0xd8] sm:$0xff]
    %v2113 = vld [vmem:[#allocation8 + $0xe0] sm:$0xff]
    %v2114 = vld [vmem:[#allocation8 + $0xe8] sm:$0xff]
    %v2115 = vld [vmem:[#allocation8 + $0xf0] sm:$0xff]
    %v2116 = vld [vmem:[#allocation8 + $0xf8] sm:$0xff]
    %v2117 = vld [vmem:[#allocation8 + $0x100] sm:$0xff]
    %v2118 = vld [vmem:[#allocation8 + $0x108] sm:$0xff]
    %v2119 = vld [vmem:[#allocation8 + $0x110] sm:$0xff]
    %v2120 = vld [vmem:[#allocation8 + $0x118] sm:$0xff]
    %v2121 = vld [vmem:[#allocation8 + $0x120] sm:$0xff]
    %v2122 = vld [vmem:[#allocation8 + $0x128] sm:$0xff]
    %v2123 = vld [vmem:[#allocation8 + $0x130] sm:$0xff]
    %v2124 = vld [vmem:[#allocation8 + $0x138] sm:$0xff]
    %v2125 = vld [vmem:[#allocation8 + $0x140] sm:$0xff]
    %v2126 = vld [vmem:[#allocation8 + $0x148] sm:$0xff]
    %v2127 = vld [vmem:[#allocation8 + $0x150] sm:$0xff]
    %v2128 = vld [vmem:[#allocation8 + $0x158] sm:$0xff]
    %v2129 = vld [vmem:[#allocation8 + $0x160] sm:$0xff]
    %v2130 = vld [vmem:[#allocation8 + $0x168] sm:$0xff]
    %v2131 = vld [vmem:[#allocation8 + $0x170] sm:$0xff]
    %v2132 = vld [vmem:[#allocation8 + $0x178] sm:$0xff]
    %v2133 = vld [vmem:[#allocation8 + $0x180] sm:$0xff]
    %v2134 = vld [vmem:[#allocation8 + $0x188] sm:$0xff]
    %v2135 = vld [vmem:[#allocation8 + $0x190] sm:$0xff]
    %v2136 = vld [vmem:[#allocation8 + $0x198] sm:$0xff]
    %v2137 = vld [vmem:[#allocation8 + $0x1a0] sm:$0xff]
    %v2138 = vld [vmem:[#allocation8 + $0x1a8] sm:$0xff]
    %v2139 = vld [vmem:[#allocation8 + $0x1b0] sm:$0xff]
    %v2140 = vld [vmem:[#allocation8 + $0x1b8] sm:$0xff]
    %v2141 = vld [vmem:[#allocation8 + $0x1c0] sm:$0xff]
    %v2142 = vld [vmem:[#allocation8 + $0x1c8] sm:$0xff]
    %v2143 = vld [vmem:[#allocation8 + $0x1d0] sm:$0xff]
    %v2144 = vld [vmem:[#allocation8 + $0x1d8] sm:$0xff]
    %v2145 = vld [vmem:[#allocation8 + $0x1e0] sm:$0xff]
    %v2146 = vld [vmem:[#allocation8 + $0x1e8] sm:$0xff]
    %v2147 = vld [vmem:[#allocation8 + $0x1f0] sm:$0xff]
    %v2148 = vld [vmem:[#allocation8 + $0x1f8] sm:$0xff]
    %v2149 = vld [vmem:[#allocation8 + $0x200] sm:$0xff]
    %v2150 = vld [vmem:[#allocation8 + $0x208] sm:$0xff]
    %v2151 = vld [vmem:[#allocation8 + $0x210] sm:$0xff]
    %v2152 = vld [vmem:[#allocation8 + $0x218] sm:$0xff]
    %v2153 = vld [vmem:[#allocation8 + $0x220] sm:$0xff]
    %v2154 = vld [vmem:[#allocation8 + $0x228] sm:$0xff]
    %v2155 = vld [vmem:[#allocation8 + $0x230] sm:$0xff]
    %v2156 = vld [vmem:[#allocation8 + $0x238] sm:$0xff]
    %v2157 = vld [vmem:[#allocation8 + $0x240] sm:$0xff]
    %v2158 = vld [vmem:[#allocation8 + $0x248] sm:$0xff]
    %v2159 = vld [vmem:[#allocation8 + $0x250] sm:$0xff]
    %v2160 = vld [vmem:[#allocation8 + $0x258] sm:$0xff]
    %v2161 = vld [vmem:[#allocation8 + $0x260] sm:$0xff]
    %v2162 = vld [vmem:[#allocation8 + $0x268] sm:$0xff]
    %v2163 = vld [vmem:[#allocation8 + $0x270] sm:$0xff]
    %v2164 = vld [vmem:[#allocation8 + $0x278] sm:$0xff]
    %v2165 = vld [vmem:[#allocation8 + $0x280] sm:$0xff]
    %v2166 = vld [vmem:[#allocation8 + $0x288] sm:$0xff]
    %v2167 = vld [vmem:[#allocation8 + $0x290] sm:$0xff]
    %v2168 = vld [vmem:[#allocation8 + $0x298] sm:$0xff]
    %v2169 = vld [vmem:[#allocation8 + $0x2a0] sm:$0xff]
    %v2170 = vld [vmem:[#allocation8 + $0x2a8] sm:$0xff]
    %v2171 = vld [vmem:[#allocation8 + $0x2b0] sm:$0xff]
    %v2172 = vld [vmem:[#allocation8 + $0x2b8] sm:$0xff]
    %v2173 = vld [vmem:[#allocation8 + $0x2c0] sm:$0xff]
    %v2174 = vld [vmem:[#allocation8 + $0x2c8] sm:$0xff]
    %v2175 = vld [vmem:[#allocation8 + $0x2d0] sm:$0xff]
    %v2176 = vld [vmem:[#allocation8 + $0x2d8] sm:$0xff]
    %v2177 = vld [vmem:[#allocation8 + $0x2e0] sm:$0xff]
    %v2178 = vld [vmem:[#allocation8 + $0x2e8] sm:$0xff]
    %v2179 = vld [vmem:[#allocation8 + $0x2f0] sm:$0xff]
    %v2180 = vld [vmem:[#allocation8 + $0x2f8] sm:$0xff]
    %v2181 = vld [vmem:[#allocation8 + $0x300] sm:$0xff]
    %v2182 = vld [vmem:[#allocation8 + $0x308] sm:$0xff]
    %v2183 = vld [vmem:[#allocation8 + $0x310] sm:$0xff]
    %v2184 = vld [vmem:[#allocation8 + $0x318] sm:$0xff]
    %v2185 = vld [vmem:[#allocation8 + $0x320] sm:$0xff]
    %v2186 = vld [vmem:[#allocation8 + $0x328] sm:$0xff]
    %v2187 = vld [vmem:[#allocation8 + $0x330] sm:$0xff]
    %v2188 = vld [vmem:[#allocation8 + $0x338] sm:$0xff]
    %v2189 = vld [vmem:[#allocation8 + $0x340] sm:$0xff]
    %v2190 = vld [vmem:[#allocation8 + $0x348] sm:$0xff]
    %v2191 = vld [vmem:[#allocation8 + $0x350] sm:$0xff]
    %v2192 = vld [vmem:[#allocation8 + $0x358] sm:$0xff]
    %v2193 = vld [vmem:[#allocation8 + $0x360] sm:$0xff]
    %v2194 = vld [vmem:[#allocation8 + $0x368] sm:$0xff]
    %v2195 = vld [vmem:[#allocation8 + $0x370] sm:$0xff]
    %v2196 = vld [vmem:[#allocation8 + $0x378] sm:$0xff]
    %v2197 = vld [vmem:[#allocation8 + $0x380] sm:$0xff]
    %v2198 = vld [vmem:[#allocation8 + $0x388] sm:$0xff]
    %v2199 = vld [vmem:[#allocation8 + $0x390] sm:$0xff]
    %v2200 = vld [vmem:[#allocation8 + $0x398] sm:$0xff]
    %v2201 = vld [vmem:[#allocation8 + $0x3a0] sm:$0xff]
    %v2202 = vld [vmem:[#allocation8 + $0x3a8] sm:$0xff]
    %v2203 = vld [vmem:[#allocation8 + $0x3b0] sm:$0xff]
    %v2204 = vld [vmem:[#allocation8 + $0x3b8] sm:$0xff]
    %v2205 = vld [vmem:[#allocation8 + $0x3c0] sm:$0xff]
    %v2206 = vld [vmem:[#allocation8 + $0x3c8] sm:$0xff]
    %v2207 = vld [vmem:[#allocation8 + $0x3d0] sm:$0xff]
    %v2208 = vld [vmem:[#allocation8 + $0x3d8] sm:$0xff]
    %v2209 = vld [vmem:[#allocation8 + $0x3e0] sm:$0xff]
    %v2210 = vld [vmem:[#allocation8 + $0x3e8] sm:$0xff]
    %v2211 = vld [vmem:[#allocation8 + $0x3f0] sm:$0xff]
    %v2212 = vld [vmem:[#allocation8 + $0x3f8] sm:$0xff]
    %v2213 = vld [vmem:[%s4] sm:$0xf]
    %v2215 = vperm.slane %v2213, 0
    %v2216 = vperm.slane %v2213, 1
    %v2217 = vperm.slane %v2213, 2
    %v2218 = vperm.slane %v2213, 3
    %v2351 = vunpack.c.l.b16 %v2085
    %v2352 = vunpack.c.h.b16 %v2085
    %v2353 = vunpack.c.l.b16 %v2086
    %v2354 = vunpack.c.h.b16 %v2086
    %v2355 = vunpack.c.l.b16 %v2087
    %v2356 = vunpack.c.h.b16 %v2087
    %v2357 = vunpack.c.l.b16 %v2088
    %v2358 = vunpack.c.h.b16 %v2088
    %v2359 = vunpack.c.l.b16 %v2089
    %v2360 = vunpack.c.h.b16 %v2089
    %v2361 = vunpack.c.l.b16 %v2090
    %v2362 = vunpack.c.h.b16 %v2090
    %v2363 = vunpack.c.l.b16 %v2091
    %v2364 = vunpack.c.h.b16 %v2091
    %v2365 = vunpack.c.l.b16 %v2092
    %v2366 = vunpack.c.h.b16 %v2092
    %v2367 = vunpack.c.l.b16 %v2093
    %v2368 = vunpack.c.h.b16 %v2093
    %v2369 = vunpack.c.l.b16 %v2094
    %v2370 = vunpack.c.h.b16 %v2094
    %v2371 = vunpack.c.l.b16 %v2095
    %v2372 = vunpack.c.h.b16 %v2095
    %v2373 = vunpack.c.l.b16 %v2096
    %v2374 = vunpack.c.h.b16 %v2096
    %v2375 = vunpack.c.l.b16 %v2097
    %v2376 = vunpack.c.h.b16 %v2097
    %v2377 = vunpack.c.l.b16 %v2098
    %v2378 = vunpack.c.h.b16 %v2098
    %v2379 = vunpack.c.l.b16 %v2099
    %v2380 = vunpack.c.h.b16 %v2099
    %v2381 = vunpack.c.l.b16 %v2100
    %v2382 = vunpack.c.h.b16 %v2100
    %v2383 = vunpack.c.l.b16 %v2101
    %v2384 = vunpack.c.h.b16 %v2101
    %v2385 = vunpack.c.l.b16 %v2102
    %v2386 = vunpack.c.h.b16 %v2102
    %v2387 = vunpack.c.l.b16 %v2103
    %v2388 = vunpack.c.h.b16 %v2103
    %v2389 = vunpack.c.l.b16 %v2104
    %v2390 = vunpack.c.h.b16 %v2104
    %v2391 = vunpack.c.l.b16 %v2105
    %v2392 = vunpack.c.h.b16 %v2105
    %v2393 = vunpack.c.l.b16 %v2106
    %v2394 = vunpack.c.h.b16 %v2106
    %v2395 = vunpack.c.l.b16 %v2107
    %v2396 = vunpack.c.h.b16 %v2107
    %v2397 = vunpack.c.l.b16 %v2108
    %v2398 = vunpack.c.h.b16 %v2108
    %v2399 = vunpack.c.l.b16 %v2109
    %v2400 = vunpack.c.h.b16 %v2109
    %v2401 = vunpack.c.l.b16 %v2110
    %v2402 = vunpack.c.h.b16 %v2110
    %v2403 = vunpack.c.l.b16 %v2111
    %v2404 = vunpack.c.h.b16 %v2111
    %v2405 = vunpack.c.l.b16 %v2112
    %v2406 = vunpack.c.h.b16 %v2112
    %v2407 = vunpack.c.l.b16 %v2113
    %v2408 = vunpack.c.h.b16 %v2113
    %v2409 = vunpack.c.l.b16 %v2114
    %v2410 = vunpack.c.h.b16 %v2114
    %v2411 = vunpack.c.l.b16 %v2115
    %v2412 = vunpack.c.h.b16 %v2115
    %v2413 = vunpack.c.l.b16 %v2116
    %v2414 = vunpack.c.h.b16 %v2116
    %v2415 = vunpack.c.l.b16 %v2117
    %v2416 = vunpack.c.h.b16 %v2117
    %v2417 = vunpack.c.l.b16 %v2118
    %v2418 = vunpack.c.h.b16 %v2118
    %v2419 = vunpack.c.l.b16 %v2119
    %v2420 = vunpack.c.h.b16 %v2119
    %v2421 = vunpack.c.l.b16 %v2120
    %v2422 = vunpack.c.h.b16 %v2120
    %v2423 = vunpack.c.l.b16 %v2121
    %v2424 = vunpack.c.h.b16 %v2121
    %v2425 = vunpack.c.l.b16 %v2122
    %v2426 = vunpack.c.h.b16 %v2122
    %v2427 = vunpack.c.l.b16 %v2123
    %v2428 = vunpack.c.h.b16 %v2123
    %v2429 = vunpack.c.l.b16 %v2124
    %v2430 = vunpack.c.h.b16 %v2124
    %v2431 = vunpack.c.l.b16 %v2125
    %v2432 = vunpack.c.h.b16 %v2125
    %v2433 = vunpack.c.l.b16 %v2126
    %v2434 = vunpack.c.h.b16 %v2126
    %v2435 = vunpack.c.l.b16 %v2127
    %v2436 = vunpack.c.h.b16 %v2127
    %v2437 = vunpack.c.l.b16 %v2128
    %v2438 = vunpack.c.h.b16 %v2128
    %v2439 = vunpack.c.l.b16 %v2129
    %v2440 = vunpack.c.h.b16 %v2129
    %v2441 = vunpack.c.l.b16 %v2130
    %v2442 = vunpack.c.h.b16 %v2130
    %v2443 = vunpack.c.l.b16 %v2131
    %v2444 = vunpack.c.h.b16 %v2131
    %v2445 = vunpack.c.l.b16 %v2132
    %v2446 = vunpack.c.h.b16 %v2132
    %v2447 = vunpack.c.l.b16 %v2133
    %v2448 = vunpack.c.h.b16 %v2133
    %v2449 = vunpack.c.l.b16 %v2134
    %v2450 = vunpack.c.h.b16 %v2134
    %v2451 = vunpack.c.l.b16 %v2135
    %v2452 = vunpack.c.h.b16 %v2135
    %v2453 = vunpack.c.l.b16 %v2136
    %v2454 = vunpack.c.h.b16 %v2136
    %v2455 = vunpack.c.l.b16 %v2137
    %v2456 = vunpack.c.h.b16 %v2137
    %v2457 = vunpack.c.l.b16 %v2138
    %v2458 = vunpack.c.h.b16 %v2138
    %v2459 = vunpack.c.l.b16 %v2139
    %v2460 = vunpack.c.h.b16 %v2139
    %v2461 = vunpack.c.l.b16 %v2140
    %v2462 = vunpack.c.h.b16 %v2140
    %v2463 = vunpack.c.l.b16 %v2141
    %v2464 = vunpack.c.h.b16 %v2141
    %v2465 = vunpack.c.l.b16 %v2142
    %v2466 = vunpack.c.h.b16 %v2142
    %v2467 = vunpack.c.l.b16 %v2143
    %v2468 = vunpack.c.h.b16 %v2143
    %v2469 = vunpack.c.l.b16 %v2144
    %v2470 = vunpack.c.h.b16 %v2144
    %v2471 = vunpack.c.l.b16 %v2145
    %v2472 = vunpack.c.h.b16 %v2145
    %v2473 = vunpack.c.l.b16 %v2146
    %v2474 = vunpack.c.h.b16 %v2146
    %v2475 = vunpack.c.l.b16 %v2147
    %v2476 = vunpack.c.h.b16 %v2147
    %v2477 = vunpack.c.l.b16 %v2148
    %v2478 = vunpack.c.h.b16 %v2148
    %v2479 = vunpack.c.l.b16 %v2149
    %v2480 = vunpack.c.h.b16 %v2149
    %v2481 = vunpack.c.l.b16 %v2150
    %v2482 = vunpack.c.h.b16 %v2150
    %v2483 = vunpack.c.l.b16 %v2151
    %v2484 = vunpack.c.h.b16 %v2151
    %v2485 = vunpack.c.l.b16 %v2152
    %v2486 = vunpack.c.h.b16 %v2152
    %v2487 = vunpack.c.l.b16 %v2153
    %v2488 = vunpack.c.h.b16 %v2153
    %v2489 = vunpack.c.l.b16 %v2154
    %v2490 = vunpack.c.h.b16 %v2154
    %v2491 = vunpack.c.l.b16 %v2155
    %v2492 = vunpack.c.h.b16 %v2155
    %v2493 = vunpack.c.l.b16 %v2156
    %v2494 = vunpack.c.h.b16 %v2156
    %v2495 = vunpack.c.l.b16 %v2157
    %v2496 = vunpack.c.h.b16 %v2157
    %v2497 = vunpack.c.l.b16 %v2158
    %v2498 = vunpack.c.h.b16 %v2158
    %v2499 = vunpack.c.l.b16 %v2159
    %v2500 = vunpack.c.h.b16 %v2159
    %v2501 = vunpack.c.l.b16 %v2160
    %v2502 = vunpack.c.h.b16 %v2160
    %v2503 = vunpack.c.l.b16 %v2161
    %v2504 = vunpack.c.h.b16 %v2161
    %v2505 = vunpack.c.l.b16 %v2162
    %v2506 = vunpack.c.h.b16 %v2162
    %v2507 = vunpack.c.l.b16 %v2163
    %v2508 = vunpack.c.h.b16 %v2163
    %v2509 = vunpack.c.l.b16 %v2164
    %v2510 = vunpack.c.h.b16 %v2164
    %v2511 = vunpack.c.l.b16 %v2165
    %v2512 = vunpack.c.h.b16 %v2165
    %v2513 = vunpack.c.l.b16 %v2166
    %v2514 = vunpack.c.h.b16 %v2166
    %v2515 = vunpack.c.l.b16 %v2167
    %v2516 = vunpack.c.h.b16 %v2167
    %v2517 = vunpack.c.l.b16 %v2168
    %v2518 = vunpack.c.h.b16 %v2168
    %v2519 = vunpack.c.l.b16 %v2169
    %v2520 = vunpack.c.h.b16 %v2169
    %v2521 = vunpack.c.l.b16 %v2170
    %v2522 = vunpack.c.h.b16 %v2170
    %v2523 = vunpack.c.l.b16 %v2171
    %v2524 = vunpack.c.h.b16 %v2171
    %v2525 = vunpack.c.l.b16 %v2172
    %v2526 = vunpack.c.h.b16 %v2172
    %v2527 = vunpack.c.l.b16 %v2173
    %v2528 = vunpack.c.h.b16 %v2173
    %v2529 = vunpack.c.l.b16 %v2174
    %v2530 = vunpack.c.h.b16 %v2174
    %v2531 = vunpack.c.l.b16 %v2175
    %v2532 = vunpack.c.h.b16 %v2175
    %v2533 = vunpack.c.l.b16 %v2176
    %v2534 = vunpack.c.h.b16 %v2176
    %v2535 = vunpack.c.l.b16 %v2177
    %v2536 = vunpack.c.h.b16 %v2177
    %v2537 = vunpack.c.l.b16 %v2178
    %v2538 = vunpack.c.h.b16 %v2178
    %v2539 = vunpack.c.l.b16 %v2179
    %v2540 = vunpack.c.h.b16 %v2179
    %v2541 = vunpack.c.l.b16 %v2180
    %v2542 = vunpack.c.h.b16 %v2180
    %v2543 = vunpack.c.l.b16 %v2181
    %v2544 = vunpack.c.h.b16 %v2181
    %v2545 = vunpack.c.l.b16 %v2182
    %v2546 = vunpack.c.h.b16 %v2182
    %v2547 = vunpack.c.l.b16 %v2183
    %v2548 = vunpack.c.h.b16 %v2183
    %v2549 = vunpack.c.l.b16 %v2184
    %v2550 = vunpack.c.h.b16 %v2184
    %v2551 = vunpack.c.l.b16 %v2185
    %v2552 = vunpack.c.h.b16 %v2185
    %v2553 = vunpack.c.l.b16 %v2186
    %v2554 = vunpack.c.h.b16 %v2186
    %v2555 = vunpack.c.l.b16 %v2187
    %v2556 = vunpack.c.h.b16 %v2187
    %v2557 = vunpack.c.l.b16 %v2188
    %v2558 = vunpack.c.h.b16 %v2188
    %v2559 = vunpack.c.l.b16 %v2189
    %v2560 = vunpack.c.h.b16 %v2189
    %v2561 = vunpack.c.l.b16 %v2190
    %v2562 = vunpack.c.h.b16 %v2190
    %v2563 = vunpack.c.l.b16 %v2191
    %v2564 = vunpack.c.h.b16 %v2191
    %v2565 = vunpack.c.l.b16 %v2192
    %v2566 = vunpack.c.h.b16 %v2192
    %v2567 = vunpack.c.l.b16 %v2193
    %v2568 = vunpack.c.h.b16 %v2193
    %v2569 = vunpack.c.l.b16 %v2194
    %v2570 = vunpack.c.h.b16 %v2194
    %v2571 = vunpack.c.l.b16 %v2195
    %v2572 = vunpack.c.h.b16 %v2195
    %v2573 = vunpack.c.l.b16 %v2196
    %v2574 = vunpack.c.h.b16 %v2196
    %v2575 = vunpack.c.l.b16 %v2197
    %v2576 = vunpack.c.h.b16 %v2197
    %v2577 = vunpack.c.l.b16 %v2198
    %v2578 = vunpack.c.h.b16 %v2198
    %v2579 = vunpack.c.l.b16 %v2199
    %v2580 = vunpack.c.h.b16 %v2199
    %v2581 = vunpack.c.l.b16 %v2200
    %v2582 = vunpack.c.h.b16 %v2200
    %v2583 = vunpack.c.l.b16 %v2201
    %v2584 = vunpack.c.h.b16 %v2201
    %v2585 = vunpack.c.l.b16 %v2202
    %v2586 = vunpack.c.h.b16 %v2202
    %v2587 = vunpack.c.l.b16 %v2203
    %v2588 = vunpack.c.h.b16 %v2203
    %v2589 = vunpack.c.l.b16 %v2204
    %v2590 = vunpack.c.h.b16 %v2204
    %v2591 = vunpack.c.l.b16 %v2205
    %v2592 = vunpack.c.h.b16 %v2205
    %v2593 = vunpack.c.l.b16 %v2206
    %v2594 = vunpack.c.h.b16 %v2206
    %v2595 = vunpack.c.l.b16 %v2207
    %v2596 = vunpack.c.h.b16 %v2207
    %v2597 = vunpack.c.l.b16 %v2208
    %v2598 = vunpack.c.h.b16 %v2208
    %v2599 = vunpack.c.l.b16 %v2209
    %v2600 = vunpack.c.h.b16 %v2209
    %v2601 = vunpack.c.l.b16 %v2210
    %v2602 = vunpack.c.h.b16 %v2210
    %v2603 = vunpack.c.l.b16 %v2211
    %v2604 = vunpack.c.h.b16 %v2211
    %v2605 = vunpack.c.l.b16 %v2212
    %v2606 = vunpack.c.h.b16 %v2212
    %v2607 = vpack.c.b16 %v2355, %v2351
    %v2608 = vpack.c.b16 %v2356, %v2352
    %v2609 = vpack.c.b16 %v2357, %v2353
    %v2610 = vpack.c.b16 %v2358, %v2354
    %v2611 = vpack.c.b16 %v2363, %v2359
    %v2612 = vpack.c.b16 %v2364, %v2360
    %v2613 = vpack.c.b16 %v2365, %v2361
    %v2614 = vpack.c.b16 %v2366, %v2362
    %v2615 = vpack.c.b16 %v2371, %v2367
    %v2616 = vpack.c.b16 %v2372, %v2368
    %v2617 = vpack.c.b16 %v2373, %v2369
    %v2618 = vpack.c.b16 %v2374, %v2370
    %v2619 = vpack.c.b16 %v2379, %v2375
    %v2620 = vpack.c.b16 %v2380, %v2376
    %v2621 = vpack.c.b16 %v2381, %v2377
    %v2622 = vpack.c.b16 %v2382, %v2378
    %v2623 = vpack.c.b16 %v2387, %v2383
    %v2624 = vpack.c.b16 %v2388, %v2384
    %v2625 = vpack.c.b16 %v2389, %v2385
    %v2626 = vpack.c.b16 %v2390, %v2386
    %v2627 = vpack.c.b16 %v2395, %v2391
    %v2628 = vpack.c.b16 %v2396, %v2392
    %v2629 = vpack.c.b16 %v2397, %v2393
    %v2630 = vpack.c.b16 %v2398, %v2394
    %v2631 = vpack.c.b16 %v2403, %v2399
    %v2632 = vpack.c.b16 %v2404, %v2400
    %v2633 = vpack.c.b16 %v2405, %v2401
    %v2634 = vpack.c.b16 %v2406, %v2402
    %v2635 = vpack.c.b16 %v2411, %v2407
    %v2636 = vpack.c.b16 %v2412, %v2408
    %v2637 = vpack.c.b16 %v2413, %v2409
    %v2638 = vpack.c.b16 %v2414, %v2410
    %v2639 = vpack.c.b16 %v2419, %v2415
    %v2640 = vpack.c.b16 %v2420, %v2416
    %v2641 = vpack.c.b16 %v2421, %v2417
    %v2642 = vpack.c.b16 %v2422, %v2418
    %v2643 = vpack.c.b16 %v2427, %v2423
    %v2644 = vpack.c.b16 %v2428, %v2424
    %v2645 = vpack.c.b16 %v2429, %v2425
    %v2646 = vpack.c.b16 %v2430, %v2426
    %v2647 = vpack.c.b16 %v2435, %v2431
    %v2648 = vpack.c.b16 %v2436, %v2432
    %v2649 = vpack.c.b16 %v2437, %v2433
    %v2650 = vpack.c.b16 %v2438, %v2434
    %v2651 = vpack.c.b16 %v2443, %v2439
    %v2652 = vpack.c.b16 %v2444, %v2440
    %v2653 = vpack.c.b16 %v2445, %v2441
    %v2654 = vpack.c.b16 %v2446, %v2442
    %v2655 = vpack.c.b16 %v2451, %v2447
    %v2656 = vpack.c.b16 %v2452, %v2448
    %v2657 = vpack.c.b16 %v2453, %v2449
    %v2658 = vpack.c.b16 %v2454, %v2450
    %v2659 = vpack.c.b16 %v2459, %v2455
    %v2660 = vpack.c.b16 %v2460, %v2456
    %v2661 = vpack.c.b16 %v2461, %v2457
    %v2662 = vpack.c.b16 %v2462, %v2458
    %v2663 = vpack.c.b16 %v2467, %v2463
    %v2664 = vpack.c.b16 %v2468, %v2464
    %v2665 = vpack.c.b16 %v2469, %v2465
    %v2666 = vpack.c.b16 %v2470, %v2466
    %v2667 = vpack.c.b16 %v2475, %v2471
    %v2668 = vpack.c.b16 %v2476, %v2472
    %v2669 = vpack.c.b16 %v2477, %v2473
    %v2670 = vpack.c.b16 %v2478, %v2474
    %v2671 = vpack.c.b16 %v2483, %v2479
    %v2672 = vpack.c.b16 %v2484, %v2480
    %v2673 = vpack.c.b16 %v2485, %v2481
    %v2674 = vpack.c.b16 %v2486, %v2482
    %v2675 = vpack.c.b16 %v2491, %v2487
    %v2676 = vpack.c.b16 %v2492, %v2488
    %v2677 = vpack.c.b16 %v2493, %v2489
    %v2678 = vpack.c.b16 %v2494, %v2490
    %v2679 = vpack.c.b16 %v2499, %v2495
    %v2680 = vpack.c.b16 %v2500, %v2496
    %v2681 = vpack.c.b16 %v2501, %v2497
    %v2682 = vpack.c.b16 %v2502, %v2498
    %v2683 = vpack.c.b16 %v2507, %v2503
    %v2684 = vpack.c.b16 %v2508, %v2504
    %v2685 = vpack.c.b16 %v2509, %v2505
    %v2686 = vpack.c.b16 %v2510, %v2506
    %v2687 = vpack.c.b16 %v2515, %v2511
    %v2688 = vpack.c.b16 %v2516, %v2512
    %v2689 = vpack.c.b16 %v2517, %v2513
    %v2690 = vpack.c.b16 %v2518, %v2514
    %v2691 = vpack.c.b16 %v2523, %v2519
    %v2692 = vpack.c.b16 %v2524, %v2520
    %v2693 = vpack.c.b16 %v2525, %v2521
    %v2694 = vpack.c.b16 %v2526, %v2522
    %v2695 = vpack.c.b16 %v2531, %v2527
    %v2696 = vpack.c.b16 %v2532, %v2528
    %v2697 = vpack.c.b16 %v2533, %v2529
    %v2698 = vpack.c.b16 %v2534, %v2530
    %v2699 = vpack.c.b16 %v2539, %v2535
    %v2700 = vpack.c.b16 %v2540, %v2536
    %v2701 = vpack.c.b16 %v2541, %v2537
    %v2702 = vpack.c.b16 %v2542, %v2538
    %v2703 = vpack.c.b16 %v2547, %v2543
    %v2704 = vpack.c.b16 %v2548, %v2544
    %v2705 = vpack.c.b16 %v2549, %v2545
    %v2706 = vpack.c.b16 %v2550, %v2546
    %v2707 = vpack.c.b16 %v2555, %v2551
    %v2708 = vpack.c.b16 %v2556, %v2552
    %v2709 = vpack.c.b16 %v2557, %v2553
    %v2710 = vpack.c.b16 %v2558, %v2554
    %v2711 = vpack.c.b16 %v2563, %v2559
    %v2712 = vpack.c.b16 %v2564, %v2560
    %v2713 = vpack.c.b16 %v2565, %v2561
    %v2714 = vpack.c.b16 %v2566, %v2562
    %v2715 = vpack.c.b16 %v2571, %v2567
    %v2716 = vpack.c.b16 %v2572, %v2568
    %v2717 = vpack.c.b16 %v2573, %v2569
    %v2718 = vpack.c.b16 %v2574, %v2570
    %v2719 = vpack.c.b16 %v2579, %v2575
    %v2720 = vpack.c.b16 %v2580, %v2576
    %v2721 = vpack.c.b16 %v2581, %v2577
    %v2722 = vpack.c.b16 %v2582, %v2578
    %v2723 = vpack.c.b16 %v2587, %v2583
    %v2724 = vpack.c.b16 %v2588, %v2584
    %v2725 = vpack.c.b16 %v2589, %v2585
    %v2726 = vpack.c.b16 %v2590, %v2586
    %v2727 = vpack.c.b16 %v2595, %v2591
    %v2728 = vpack.c.b16 %v2596, %v2592
    %v2729 = vpack.c.b16 %v2597, %v2593
    %v2730 = vpack.c.b16 %v2598, %v2594
    %v2731 = vpack.c.b16 %v2603, %v2599
    %v2732 = vpack.c.b16 %v2604, %v2600
    %v2733 = vpack.c.b16 %v2605, %v2601
    %v2734 = vpack.c.b16 %v2606, %v2602
    %2863 = vmatpush.bf16.msra.mxu0 %v2635
    %2864 = vmatpush.bf16.msra.mxu0 %v2631
    %2865 = vmatpush.bf16.msra.mxu0 %v2627
    %2866 = vmatpush.bf16.msra.mxu0 %v2623
    %2867 = vmatpush.bf16.msra.mxu0 %v2619
    %2868 = vmatpush.bf16.msra.mxu0 %v2615
    %2869 = vmatpush.bf16.msra.mxu0 %v2611
    %2870 = vmatpush.bf16.msra.mxu0 %v2607
    %2871 = vmatmul.bf16.gmra.mxu0 %v2081
    %v2872 = vpop.f32.mrf.mxu0
    %v2873 = vadd.f32 %v2215, %v2872
    %v2874 = vpop.f32.mrf.mxu0
    %2875 = vdwg.mxu0
    %2876 = vmatpush.bf16.msra.mxu0 %v2667
    %2877 = vmatpush.bf16.msra.mxu0 %v2663
    %2878 = vmatpush.bf16.msra.mxu0 %v2659
    %2879 = vmatpush.bf16.msra.mxu0 %v2655
    %2880 = vmatpush.bf16.msra.mxu0 %v2651
    %2881 = vmatpush.bf16.msra.mxu0 %v2647
    %2882 = vmatpush.bf16.msra.mxu0 %v2643
    %2883 = vmatpush.bf16.msra.mxu0 %v2639
    %2884 = vmatmul.bf16.gmra.mxu0 %v2082
    %v2885 = vpop.f32.mrf.mxu0
    %v2886 = vadd.f32 %v2873, %v2885
    %v2887 = vpop.f32.mrf.mxu0
    %2888 = vdwg.mxu0
    %2889 = vmatpush.bf16.msra.mxu0 %v2699
    %2890 = vmatpush.bf16.msra.mxu0 %v2695
    %2891 = vmatpush.bf16.msra.mxu0 %v2691
    %2892 = vmatpush.bf16.msra.mxu0 %v2687
    %2893 = vmatpush.bf16.msra.mxu0 %v2683
    %2894 = vmatpush.bf16.msra.mxu0 %v2679
    %2895 = vmatpush.bf16.msra.mxu0 %v2675
    %2896 = vmatpush.bf16.msra.mxu0 %v2671
    %2897 = vmatmul.bf16.gmra.mxu0 %v2083
    %v2898 = vpop.f32.mrf.mxu0
    %v2899 = vadd.f32 %v2886, %v2898
    %v2900 = vpop.f32.mrf.mxu0
    %2901 = vdwg.mxu0
    %2902 = vmatpush.bf16.msra.mxu0 %v2731
    %2903 = vmatpush.bf16.msra.mxu0 %v2727
    %2904 = vmatpush.bf16.msra.mxu0 %v2723
    %2905 = vmatpush.bf16.msra.mxu0 %v2719
    %2906 = vmatpush.bf16.msra.mxu0 %v2715
    %2907 = vmatpush.bf16.msra.mxu0 %v2711
    %2908 = vmatpush.bf16.msra.mxu0 %v2707
    %2909 = vmatpush.bf16.msra.mxu0 %v2703
    %2910 = vmatmul.bf16.gmra.mxu0 %v2084
    %v2911 = vpop.f32.mrf.mxu0
    %v2912 = vadd.f32 %v2899, %v2911
    %v2913 = vpop.f32.mrf.mxu0
    %2914 = vdwg.mxu0
    %2915 = vmatpush.bf16.msra.mxu0 %v2636
    %2916 = vmatpush.bf16.msra.mxu0 %v2632
    %2917 = vmatpush.bf16.msra.mxu0 %v2628
    %2918 = vmatpush.bf16.msra.mxu0 %v2624
    %2919 = vmatpush.bf16.msra.mxu0 %v2620
    %2920 = vmatpush.bf16.msra.mxu0 %v2616
    %2921 = vmatpush.bf16.msra.mxu0 %v2612
    %2922 = vmatpush.bf16.msra.mxu0 %v2608
    %2923 = vmatmul.bf16.gmra.mxu0 %v2081
    %v2924 = vpop.f32.mrf.mxu0
    %v2925 = vadd.f32 %v2216, %v2924
    %v2926 = vpop.f32.mrf.mxu0
    %2927 = vdwg.mxu0
    %2928 = vmatpush.bf16.msra.mxu0 %v2668
    %2929 = vmatpush.bf16.msra.mxu0 %v2664
    %2930 = vmatpush.bf16.msra.mxu0 %v2660
    %2931 = vmatpush.bf16.msra.mxu0 %v2656
    %2932 = vmatpush.bf16.msra.mxu0 %v2652
    %2933 = vmatpush.bf16.msra.mxu0 %v2648
    %2934 = vmatpush.bf16.msra.mxu0 %v2644
    %2935 = vmatpush.bf16.msra.mxu0 %v2640
    %2936 = vmatmul.bf16.gmra.mxu0 %v2082
    %v2937 = vpop.f32.mrf.mxu0
    %v2938 = vadd.f32 %v2925, %v2937
    %v2939 = vpop.f32.mrf.mxu0
    %2940 = vdwg.mxu0
    %2941 = vmatpush.bf16.msra.mxu0 %v2700
    %2942 = vmatpush.bf16.msra.mxu0 %v2696
    %2943 = vmatpush.bf16.msra.mxu0 %v2692
    %2944 = vmatpush.bf16.msra.mxu0 %v2688
    %2945 = vmatpush.bf16.msra.mxu0 %v2684
    %2946 = vmatpush.bf16.msra.mxu0 %v2680
    %2947 = vmatpush.bf16.msra.mxu0 %v2676
    %2948 = vmatpush.bf16.msra.mxu0 %v2672
    %2949 = vmatmul.bf16.gmra.mxu0 %v2083
    %v2950 = vpop.f32.mrf.mxu0
    %v2951 = vadd.f32 %v2938, %v2950
    %v2952 = vpop.f32.mrf.mxu0
    %2953 = vdwg.mxu0
    %2954 = vmatpush.bf16.msra.mxu0 %v2732
    %2955 = vmatpush.bf16.msra.mxu0 %v2728
    %2956 = vmatpush.bf16.msra.mxu0 %v2724
    %2957 = vmatpush.bf16.msra.mxu0 %v2720
    %2958 = vmatpush.bf16.msra.mxu0 %v2716
    %2959 = vmatpush.bf16.msra.mxu0 %v2712
    %2960 = vmatpush.bf16.msra.mxu0 %v2708
    %2961 = vmatpush.bf16.msra.mxu0 %v2704
    %2962 = vmatmul.bf16.gmra.mxu0 %v2084
    %v2963 = vpop.f32.mrf.mxu0
    %v2964 = vadd.f32 %v2951, %v2963
    %v2965 = vpop.f32.mrf.mxu0
    %2966 = vdwg.mxu0
    %2967 = vmatpush.bf16.msra.mxu0 %v2637
    %2968 = vmatpush.bf16.msra.mxu0 %v2633
    %2969 = vmatpush.bf16.msra.mxu0 %v2629
    %2970 = vmatpush.bf16.msra.mxu0 %v2625
    %2971 = vmatpush.bf16.msra.mxu0 %v2621
    %2972 = vmatpush.bf16.msra.mxu0 %v2617
    %2973 = vmatpush.bf16.msra.mxu0 %v2613
    %2974 = vmatpush.bf16.msra.mxu0 %v2609
    %2975 = vmatmul.bf16.gmra.mxu0 %v2081
    %v2976 = vpop.f32.mrf.mxu0
    %v2977 = vadd.f32 %v2217, %v2976
    %v2978 = vpop.f32.mrf.mxu0
    %2979 = vdwg.mxu0
    %2980 = vmatpush.bf16.msra.mxu0 %v2669
    %2981 = vmatpush.bf16.msra.mxu0 %v2665
    %2982 = vmatpush.bf16.msra.mxu0 %v2661
    %2983 = vmatpush.bf16.msra.mxu0 %v2657
    %2984 = vmatpush.bf16.msra.mxu0 %v2653
    %2985 = vmatpush.bf16.msra.mxu0 %v2649
    %2986 = vmatpush.bf16.msra.mxu0 %v2645
    %2987 = vmatpush.bf16.msra.mxu0 %v2641
    %2988 = vmatmul.bf16.gmra.mxu0 %v2082
    %v2989 = vpop.f32.mrf.mxu0
    %v2990 = vadd.f32 %v2977, %v2989
    %v2991 = vpop.f32.mrf.mxu0
    %2992 = vdwg.mxu0
    %2993 = vmatpush.bf16.msra.mxu0 %v2701
    %2994 = vmatpush.bf16.msra.mxu0 %v2697
    %2995 = vmatpush.bf16.msra.mxu0 %v2693
    %2996 = vmatpush.bf16.msra.mxu0 %v2689
    %2997 = vmatpush.bf16.msra.mxu0 %v2685
    %2998 = vmatpush.bf16.msra.mxu0 %v2681
    %2999 = vmatpush.bf16.msra.mxu0 %v2677
    %3000 = vmatpush.bf16.msra.mxu0 %v2673
    %3001 = vmatmul.bf16.gmra.mxu0 %v2083
    %v3002 = vpop.f32.mrf.mxu0
    %v3003 = vadd.f32 %v2990, %v3002
    %v3004 = vpop.f32.mrf.mxu0
    %3005 = vdwg.mxu0
    %3006 = vmatpush.bf16.msra.mxu0 %v2733
    %3007 = vmatpush.bf16.msra.mxu0 %v2729
    %3008 = vmatpush.bf16.msra.mxu0 %v2725
    %3009 = vmatpush.bf16.msra.mxu0 %v2721
    %3010 = vmatpush.bf16.msra.mxu0 %v2717
    %3011 = vmatpush.bf16.msra.mxu0 %v2713
    %3012 = vmatpush.bf16.msra.mxu0 %v2709
    %3013 = vmatpush.bf16.msra.mxu0 %v2705
    %3014 = vmatmul.bf16.gmra.mxu0 %v2084
    %v3015 = vpop.f32.mrf.mxu0
    %v3016 = vadd.f32 %v3003, %v3015
    %v3017 = vpop.f32.mrf.mxu0
    %3018 = vdwg.mxu0
    %3019 = vmatpush.bf16.msra.mxu0 %v2638
    %3020 = vmatpush.bf16.msra.mxu0 %v2634
    %3021 = vmatpush.bf16.msra.mxu0 %v2630
    %3022 = vmatpush.bf16.msra.mxu0 %v2626
    %3023 = vmatpush.bf16.msra.mxu0 %v2622
    %3024 = vmatpush.bf16.msra.mxu0 %v2618
    %3025 = vmatpush.bf16.msra.mxu0 %v2614
    %3026 = vmatpush.bf16.msra.mxu0 %v2610
    %3027 = vmatmul.bf16.gmra.mxu0 %v2081
    %v3028 = vpop.f32.mrf.mxu0
    %v3029 = vadd.f32 %v2218, %v3028
    %v3030 = vpop.f32.mrf.mxu0
    %3031 = vdwg.mxu0
    %3032 = vmatpush.bf16.msra.mxu0 %v2670
    %3033 = vmatpush.bf16.msra.mxu0 %v2666
    %3034 = vmatpush.bf16.msra.mxu0 %v2662
    %3035 = vmatpush.bf16.msra.mxu0 %v2658
    %3036 = vmatpush.bf16.msra.mxu0 %v2654
    %3037 = vmatpush.bf16.msra.mxu0 %v2650
    %3038 = vmatpush.bf16.msra.mxu0 %v2646
    %3039 = vmatpush.bf16.msra.mxu0 %v2642
    %3040 = vmatmul.bf16.gmra.mxu0 %v2082
    %v3041 = vpop.f32.mrf.mxu0
    %v3042 = vadd.f32 %v3029, %v3041
    %v3043 = vpop.f32.mrf.mxu0
    %3044 = vdwg.mxu0
    %3045 = vmatpush.bf16.msra.mxu0 %v2702
    %3046 = vmatpush.bf16.msra.mxu0 %v2698
    %3047 = vmatpush.bf16.msra.mxu0 %v2694
    %3048 = vmatpush.bf16.msra.mxu0 %v2690
    %3049 = vmatpush.bf16.msra.mxu0 %v2686
    %3050 = vmatpush.bf16.msra.mxu0 %v2682
    %3051 = vmatpush.bf16.msra.mxu0 %v2678
    %3052 = vmatpush.bf16.msra.mxu0 %v2674
    %3053 = vmatmul.bf16.gmra.mxu0 %v2083
    %v3054 = vpop.f32.mrf.mxu0
    %v3055 = vadd.f32 %v3042, %v3054
    %v3056 = vpop.f32.mrf.mxu0
    %3057 = vdwg.mxu0
    %3058 = vmatpush.bf16.msra.mxu0 %v2734
    %3059 = vmatpush.bf16.msra.mxu0 %v2730
    %3060 = vmatpush.bf16.msra.mxu0 %v2726
    %3061 = vmatpush.bf16.msra.mxu0 %v2722
    %3062 = vmatpush.bf16.msra.mxu0 %v2718
    %3063 = vmatpush.bf16.msra.mxu0 %v2714
    %3064 = vmatpush.bf16.msra.mxu0 %v2710
    %3065 = vmatpush.bf16.msra.mxu0 %v2706
    %3066 = vmatmul.bf16.gmra.mxu0 %v2084
    %v3067 = vpop.f32.mrf.mxu0
    %v3068 = vadd.f32 %v3055, %v3067
    %v3069 = vpop.f32.mrf.mxu0
    %3070 = vdwg.mxu0
    %v3071 = vmax.f32 %v2912, 0.0
    %v3072 = vmax.f32 %v2964, 0.0
    %v3073 = vmax.f32 %v3016, 0.0
    %v3074 = vmax.f32 %v3068, 0.0
    %v3075 = vld [vmem:[#allocation10] sm:$0xf]
    %v3076 = vunpack.c.l.bf16 %v3075
    %v3078 = vperm.slane %v3076, 0
    %v3079 = vperm.slane %v3076, 2
    %v3080 = vperm.slane %v3076, 4
    %v3081 = vperm.slane %v3076, 6
    %v3086 = vperm.slane %v3078, 0
    %v3087 = vperm.slane %v3079, 0
    %v3088 = vperm.slane %v3080, 0
    %v3089 = vperm.slane %v3081, 0
    %v3090 = vmul.f32 %v3071, %v3086
    %v3091 = vmul.f32 %v3072, %v3087
    %v3092 = vmul.f32 %v3073, %v3088
    %v3093 = vmul.f32 %v3074, %v3089
    %v3094 = vadd.f32 %v3090, %v3091
    %v3095 = vadd.f32 %v3094, %v3092
    %v3096 = vadd.f32 %v3095, %v3093
    %3097 = vadd.xlane.f32.xlu0 %v3096
    %v3098 = vpop.xlane.xlu0 %3097
    %s3099 = sld [smem:[#allocation2]]
    %v3100 = vstv %s3099
    %v3101 = vadd.f32 %v3098, %v3100
    %vm3102 = vcmask 7168
    %3103 = vst.msk [vmem:[%s7] sm:$0xff] %vm3102, %v3101
    // Predicated region
    $region50: #{tpu_custom_call.1} parent=1 // pred_check
      _
    $region51: #{tpu_custom_call.1} parent=1 // pred_check_branch
      %3105 = sbr.rel (0) target = $region53
    $region52: #{tpu_custom_call.1} parent=1 // pred_region
      _
    $region53: #{tpu_custom_call.1} parent=1 // pred_fallthru
      _
    // Predicated region
    $region54: #{tpu_custom_call.1} parent=1 // pred_check
      _
    $region55: #{tpu_custom_call.1} parent=1 // pred_check_branch
      %3107 = sbr.rel (0) target = $region57
    $region56: #{tpu_custom_call.1} parent=1 // pred_region
      _
    $region57: #{tpu_custom_call.1} parent=1 // pred_fallthru
      _
    %3108 = vsyncpa [#allocation4], 1
    %3109 = vsyncpa [#allocation6], 1
    %3110 = vsyncpa [#allocation9], 1

</llo_original>
